<compile_context>
chip_gen: v5e
topology: v5e:2x2
jax: 0.10.0
libtpu: 0.0.40
codegen_flags: <defaults>
</compile_context>

<pallas_src>
import jax
import jax.numpy as jnp
from jax import lax
from jax.experimental import pallas as pl
from jax.experimental.pallas import tpu as pltpu


def _fold_bn(bn, eps=1e-5):
    gamma, beta, mean, var = bn
    scale = gamma / jnp.sqrt(var + eps)
    return scale, beta - mean * scale


def _band_weights(w, W):
    """PyTorch (Cout, Cin, 3, 3) -> 3 banded matrices (3, W*Cin, W*Cout).

    bands[dh][w_in*Cin + ci, w_out*Cout + co] = w[co, ci, dh, dw] whenever
    w_in == w_out + dw - 1 (zero otherwise), so a single matmul of a flattened
    image row with bands[dh] performs the dw/ci part of the 3x3 conv including
    the W-boundary zero padding.
    """
    wt = jnp.transpose(w, (2, 3, 1, 0)).astype(jnp.float32)   # (dh, dw, Cin, Cout)
    cols = jnp.arange(W)
    bands = []
    for dh in range(3):
        m = jnp.zeros((W * w.shape[1], W * w.shape[0]), jnp.float32)
        for dw in range(3):
            sel = (cols[:, None] == (cols[None, :] + dw - 1)).astype(jnp.float32)
            m = m + jnp.kron(sel, wt[dh, dw])
        bands.append(m)
    return jnp.stack(bands, axis=0)


def conv_residual_forward(x_nchw, params, eps=1e-5, tb_max=16):
    N, Cin, H, W = x_nchw.shape
    Cout = params["w1"].shape[0]
    WCi, WCo = W * Cin, W * Cout

    # Batch tile: fill the MXU M dimension, but keep >= 2 grid steps whenever
    # N >= 2 so both v7x TensorCores get work.
    TB = max(1, min(tb_max, -(-N // 2)))
    Npad = -(-N // TB) * TB
    grid = Npad // TB
    H_pad = -(-(H + 2) // 8) * 8            # padded rows per image (mult. of 8)
    M = TB * H_pad                          # matmul M dimension per grid step

    # NCHW -> row-flattened NHWC: (N, H, W*Cin); pad batch to a multiple of TB.
    x_flat = jnp.transpose(x_nchw, (0, 2, 3, 1)).reshape(N, H, WCi)
    x_flat = x_flat.astype(jnp.float32)
    if Npad != N:
        x_flat = jnp.concatenate(
            [x_flat, jnp.zeros((Npad - N, H, WCi), jnp.float32)], axis=0)

    # Fold BN running stats; fold conv biases.
    s1, o1 = _fold_bn(params["bn1"], eps)               # (Cin,)
    s2, o2 = _fold_bn(params["bn2"], eps)               # (Cout,)
    ss, osb = _fold_bn(params["bns"], eps)              # (Cin,)
    o2 = o2 + s2 * params["b1"]                         # fold conv1 bias into BN2
    bsum = params["b2"] + params["bs"]                  # single final bias add

    s1t, o1t = jnp.tile(s1, W)[None], jnp.tile(o1, W)[None]        # (1, WCi)
    s2t, o2t = jnp.tile(s2, W)[None], jnp.tile(o2, W)[None]        # (1, WCo)
    sst, ost = jnp.tile(ss, W)[None], jnp.tile(osb, W)[None]       # (1, WCi)
    bst = jnp.tile(bsum, W)[None].astype(jnp.float32)              # (1, WCo)

    # Banded weights as bf16 MXU operands (f32 accumulation in-kernel).
    w1b = _band_weights(params["w1"], W).astype(jnp.bfloat16)      # (3, WCi, WCo)
    w2b = _band_weights(params["w2"], W).astype(jnp.bfloat16)      # (3, WCo, WCo)
    wsb = _band_weights(params["ws"], W).astype(jnp.bfloat16)      # (3, WCi, WCo)

    def kernel(x_ref, s1_ref, o1_ref, s2_ref, o2_ref, ss_ref, os_ref,
               w1_ref, w2_ref, ws_ref, bs_ref, out_ref,
               padi_ref, pads_ref, pado_ref):
        # Zero the scratches: keeps the H-boundary rows, inter-image separator
        # rows and tail rows at zero (re-done each step -> order independent).
        padi_ref[...] = jnp.zeros_like(padi_ref)
        pads_ref[...] = jnp.zeros_like(pads_ref)
        pado_ref[...] = jnp.zeros_like(pado_ref)

        x = x_ref[...]                                               # (TB, H, WCi)
        a_d = jnp.maximum(x * s1_ref[...] + o1_ref[...], 0.0)        # double_conv in
        a_s = jnp.maximum(x * ss_ref[...] + os_ref[...], 0.0)        # shortcut in
        for b in range(TB):      # scatter valid rows into the concat-padded layout
            padi_ref[b * H_pad + 1:b * H_pad + 1 + H, :] = a_d[b]
            pads_ref[b * H_pad + 1:b * H_pad + 1 + H, :] = a_s[b]

        def conv3x3(src_ref, w_ref):
            # 3 MXU matmuls over all M = TB*H_pad concatenated rows; W-border
            # zeros live in the band structure, H-borders in the zero rows.
            acc = jnp.dot(src_ref[0:M, :].astype(jnp.bfloat16), w_ref[0],
                          preferred_element_type=jnp.float32)
            acc = acc + jnp.dot(src_ref[1:M + 1, :].astype(jnp.bfloat16), w_ref[1],
                                preferred_element_type=jnp.float32)
            acc = acc + jnp.dot(src_ref[2:M + 2, :].astype(jnp.bfloat16), w_ref[2],
                                preferred_element_type=jnp.float32)
            return acc                                               # (M, WCo) f32

        def valid(y):            # (M, WCo) -> (TB, H, WCo); drop boundary rows
            return y.reshape(TB, H_pad, WCo)[:, :H, :]

        # ---- shortcut branch (independent chain; stage result in out_ref) ----
        out_s = conv3x3(pads_ref, ws_ref)
        out_ref[...] = (valid(out_s) + bs_ref[...]).astype(out_ref.dtype)

        # ---- double_conv branch ----------------------------------------------
        y1 = conv3x3(padi_ref, w1_ref)                               # conv1, no bias
        a2 = jnp.maximum(valid(y1) * s2_ref[...] + o2_ref[...], 0.0)
        for b in range(TB):
            pado_ref[b * H_pad + 1:b * H_pad + 1 + H, :] = a2[b]
        out_d = conv3x3(pado_ref, w2_ref)

        out_ref[...] = out_ref[...] + valid(out_d).astype(out_ref.dtype)

    def full_spec(a):
        r = a.ndim
        return pl.BlockSpec(a.shape, lambda n, _r=r: (0,) * _r)

    in_specs = [
        pl.BlockSpec((TB, H, WCi), lambda n: (n, 0, 0)),
        full_spec(s1t), full_spec(o1t),
        full_spec(s2t), full_spec(o2t),
        full_spec(sst), full_spec(ost),
        full_spec(w1b), full_spec(w2b), full_spec(wsb),
        full_spec(bst),
    ]
    out_spec = pl.BlockSpec((TB, H, WCo), lambda n: (n, 0, 0))

    out_flat = pl.pallas_call(
        kernel,
        out_shape=jax.ShapeDtypeStruct((Npad, H, WCo), jnp.float32),
        grid_spec=pltpu.PrefetchScalarGridSpec(
            num_scalar_prefetch=0,
            grid=(grid,),
            in_specs=in_specs,
            out_specs=out_spec,
            scratch_shapes=[pltpu.VMEM((M + 8, WCi), jnp.float32),   # double_conv in
                            pltpu.VMEM((M + 8, WCi), jnp.float32),   # shortcut in
                            pltpu.VMEM((M + 8, WCo), jnp.float32)]), # conv2 in
        compiler_params=pltpu.CompilerParams(
            dimension_semantics=("parallel",)),
    )(x_flat, s1t, o1t, s2t, o2t, sst, ost, w1b, w2b, wsb, bst)

    out = out_flat[:N].reshape(N, H, W, Cout)
    # TODO(synk): fuse this NHWC->NCHW transpose into the consumer.
    return jnp.transpose(out, (0, 3, 1, 2))


def _reference(x_nchw, params, eps=1e-5):
    """Pure-JAX f32 reference (lax.conv) for correctness checking."""
    x = jnp.transpose(x_nchw, (0, 2, 3, 1)).astype(jnp.float32)

    def bn_relu(t, bn):
        gamma, beta, mean, var = bn
        return jnp.maximum((t - mean) / jnp.sqrt(var + eps) * gamma + beta, 0.0)

    def conv(t, w, b):
        wh = jnp.transpose(w, (2, 3, 1, 0))          # HWIO
        y = lax.conv_general_dilated(t, wh, (1, 1), "SAME",
                                     dimension_numbers=("NHWC", "HWIO", "NHWC"))
        return y + b

    a = bn_relu(x, params["bn1"])
    y = conv(a, params["w1"], params["b1"])
    a = bn_relu(y, params["bn2"])
    y = conv(a, params["w2"], params["b2"])
    s = bn_relu(x, params["bns"])
    s = conv(s, params["ws"], params["bs"])
    return jnp.transpose(y + s, (0, 3, 1, 2))


def _make_params(key, in_channels, out_channels):
    ks = jax.random.split(key, 12)

    def bn_params(k, c):
        k1, k2, k3, k4 = jax.random.split(k, 4)
        gamma = 1.0 + 0.1 * jax.random.normal(k1, (c,), jnp.float32)
        beta = 0.1 * jax.random.normal(k2, (c,), jnp.float32)
        mean = 0.1 * jax.random.normal(k3, (c,), jnp.float32)
        var = jax.random.uniform(k4, (c,), jnp.float32, 0.5, 1.5)
        return gamma, beta, mean, var

    return {
        "bn1": bn_params(ks[0], in_channels),
        "bn2": bn_params(ks[1], out_channels),
        "bns": bn_params(ks[2], in_channels),
        "w1": 0.1 * jax.random.normal(ks[3], (out_channels, in_channels, 3, 3), jnp.float32),
        "b1": 0.05 * jax.random.normal(ks[4], (out_channels,), jnp.float32),
        "w2": 0.1 * jax.random.normal(ks[5], (out_channels, out_channels, 3, 3), jnp.float32),
        "b2": 0.05 * jax.random.normal(ks[6], (out_channels,), jnp.float32),
        "ws": 0.1 * jax.random.normal(ks[7], (out_channels, in_channels, 3, 3), jnp.float32),
        "bs": 0.05 * jax.random.normal(ks[8], (out_channels,), jnp.float32),
    }


if __name__ == "__main__":
    Cin, Cout, H, W = 4, 8, 16, 16
    key = jax.random.PRNGKey(0)

    # Primary config exercises batch tiling (TB=8, grid=2); secondary exercises
    # the batch-padding path (N=3 -> TB=2, Npad=4, grid=2).
    for N in (16, 3):
        kx, kp = jax.random.split(jax.random.fold_in(key, N))
        x = jax.random.normal(kx, (N, Cin, H, W), jnp.float32)   # NCHW, like PyTorch
        params = _make_params(kp, Cin, Cout)

        out = conv_residual_forward(x, params)
        out = jax.block_until_ready(out)

        ref = _reference(x, params)
        assert out.shape == (N, Cout, H, W), out.shape
        max_err = float(jnp.max(jnp.abs(out - ref)))
        # bf16 MXU operands (f32 accumulation) -> relaxed tolerance vs f32 ref.
        assert jnp.allclose(out, ref, atol=5e-2, rtol=5e-2), (N, max_err)

    print("KERNEL_OK")
</pallas_src>

<mosaic_0001>
module attributes {stable_mosaic.version = 11 : i64} {
  func.func @kernel(%arg0: i32, %arg1: memref<8x16x64xf32, #tpu.memory_space<vmem>>, %arg2: memref<1x64xf32, #tpu.memory_space<vmem>>, %arg3: memref<1x64xf32, #tpu.memory_space<vmem>>, %arg4: memref<1x128xf32, #tpu.memory_space<vmem>>, %arg5: memref<1x128xf32, #tpu.memory_space<vmem>>, %arg6: memref<1x64xf32, #tpu.memory_space<vmem>>, %arg7: memref<1x64xf32, #tpu.memory_space<vmem>>, %arg8: memref<3x64x128xbf16, #tpu.memory_space<vmem>>, %arg9: memref<3x128x128xbf16, #tpu.memory_space<vmem>>, %arg10: memref<3x64x128xbf16, #tpu.memory_space<vmem>>, %arg11: memref<1x128xf32, #tpu.memory_space<vmem>>, %arg12: memref<8x16x128xf32, #tpu.memory_space<vmem>>, %arg13: memref<200x64xf32, #tpu.memory_space<vmem>>, %arg14: memref<200x64xf32, #tpu.memory_space<vmem>>, %arg15: memref<200x128xf32, #tpu.memory_space<vmem>>) attributes {dimension_semantics = [#tpu.dimension_semantics<parallel>], iteration_bounds = array<i64: 2>, scalar_prefetch = 0 : i64, scratch_operands = 3 : i64, tpu.core_type = #tpu.core_type<tc>, window_params = [{transform_indices = @transform_0, window_bounds = array<i64: 8, 16, 64>}, {pipeline_mode = #tpu.pipeline_mode<synchronous>, transform_indices = @transform_1, window_bounds = array<i64: 1, 64>}, {pipeline_mode = #tpu.pipeline_mode<synchronous>, transform_indices = @transform_2, window_bounds = array<i64: 1, 64>}, {pipeline_mode = #tpu.pipeline_mode<synchronous>, transform_indices = @transform_3, window_bounds = array<i64: 1, 128>}, {pipeline_mode = #tpu.pipeline_mode<synchronous>, transform_indices = @transform_4, window_bounds = array<i64: 1, 128>}, {pipeline_mode = #tpu.pipeline_mode<synchronous>, transform_indices = @transform_5, window_bounds = array<i64: 1, 64>}, {pipeline_mode = #tpu.pipeline_mode<synchronous>, transform_indices = @transform_6, window_bounds = array<i64: 1, 64>}, {pipeline_mode = #tpu.pipeline_mode<synchronous>, transform_indices = @transform_7, window_bounds = array<i64: 3, 64, 128>}, {pipeline_mode = #tpu.pipeline_mode<synchronous>, transform_indices = @transform_8, window_bounds = array<i64: 3, 128, 128>}, {pipeline_mode = #tpu.pipeline_mode<synchronous>, transform_indices = @transform_9, window_bounds = array<i64: 3, 64, 128>}, {pipeline_mode = #tpu.pipeline_mode<synchronous>, transform_indices = @transform_10, window_bounds = array<i64: 1, 128>}, {transform_indices = @transform_11, window_bounds = array<i64: 8, 16, 128>}]} {
    %cst = arith.constant 0.000000e+00 : f32
    %0 = vector.broadcast %cst : f32 to vector<200x64xf32>
    %c0 = arith.constant 0 : index
    %c0_0 = arith.constant 0 : index
    %1 = vector.load %arg13[%c0, %c0_0] : memref<200x64xf32, #tpu.memory_space<vmem>>, vector<200x64xf32>
    tpu.vector_store %arg13[%c0, %c0_0], %0 {strides = array<i32>} : memref<200x64xf32, #tpu.memory_space<vmem>>, vector<200x64xf32>,
    %cst_1 = arith.constant 0.000000e+00 : f32
    %2 = vector.broadcast %cst_1 : f32 to vector<200x64xf32>
    %c0_2 = arith.constant 0 : index
    %c0_3 = arith.constant 0 : index
    %3 = vector.load %arg14[%c0_2, %c0_3] : memref<200x64xf32, #tpu.memory_space<vmem>>, vector<200x64xf32>
    tpu.vector_store %arg14[%c0_2, %c0_3], %2 {strides = array<i32>} : memref<200x64xf32, #tpu.memory_space<vmem>>, vector<200x64xf32>,
    %cst_4 = arith.constant 0.000000e+00 : f32
    %4 = vector.broadcast %cst_4 : f32 to vector<200x128xf32>
    %c0_5 = arith.constant 0 : index
    %c0_6 = arith.constant 0 : index
    %5 = vector.load %arg15[%c0_5, %c0_6] : memref<200x128xf32, #tpu.memory_space<vmem>>, vector<200x128xf32>
    tpu.vector_store %arg15[%c0_5, %c0_6], %4 {strides = array<i32>} : memref<200x128xf32, #tpu.memory_space<vmem>>, vector<200x128xf32>,
    %c0_7 = arith.constant 0 : index
    %c0_8 = arith.constant 0 : index
    %c0_9 = arith.constant 0 : index
    %6 = vector.load %arg1[%c0_7, %c0_8, %c0_9] : memref<8x16x64xf32, #tpu.memory_space<vmem>>, vector<8x16x64xf32>
    %c0_10 = arith.constant 0 : index
    %c0_11 = arith.constant 0 : index
    %7 = vector.load %arg2[%c0_10, %c0_11] : memref<1x64xf32, #tpu.memory_space<vmem>>, vector<1x64xf32>
    %8 = vector.shape_cast %7 : vector<1x64xf32> to vector<1x1x64xf32>
    %9 = vector.broadcast %8 : vector<1x1x64xf32> to vector<8x16x64xf32>
    %10 = arith.mulf %6, %9 : vector<8x16x64xf32>
    %c0_12 = arith.constant 0 : index
    %c0_13 = arith.constant 0 : index
    %11 = vector.load %arg3[%c0_12, %c0_13] : memref<1x64xf32, #tpu.memory_space<vmem>>, vector<1x64xf32>
    %12 = vector.shape_cast %11 : vector<1x64xf32> to vector<1x1x64xf32>
    %13 = vector.broadcast %12 : vector<1x1x64xf32> to vector<8x16x64xf32>
    %14 = arith.addf %10, %13 : vector<8x16x64xf32>
    %cst_14 = arith.constant 0.000000e+00 : f32
    %15 = vector.broadcast %cst_14 : f32 to vector<8x16x64xf32>
    %16 = arith.maximumf %14, %15 : vector<8x16x64xf32>
    %c0_15 = arith.constant 0 : index
    %c0_16 = arith.constant 0 : index
    %17 = vector.load %arg6[%c0_15, %c0_16] : memref<1x64xf32, #tpu.memory_space<vmem>>, vector<1x64xf32>
    %18 = vector.shape_cast %17 : vector<1x64xf32> to vector<1x1x64xf32>
    %19 = vector.broadcast %18 : vector<1x1x64xf32> to vector<8x16x64xf32>
    %20 = arith.mulf %6, %19 : vector<8x16x64xf32>
    %c0_17 = arith.constant 0 : index
    %c0_18 = arith.constant 0 : index
    %21 = vector.load %arg7[%c0_17, %c0_18] : memref<1x64xf32, #tpu.memory_space<vmem>>, vector<1x64xf32>
    %22 = vector.shape_cast %21 : vector<1x64xf32> to vector<1x1x64xf32>
    %23 = vector.broadcast %22 : vector<1x1x64xf32> to vector<8x16x64xf32>
    %24 = arith.addf %20, %23 : vector<8x16x64xf32>
    %cst_19 = arith.constant 0.000000e+00 : f32
    %25 = vector.broadcast %cst_19 : f32 to vector<8x16x64xf32>
    %26 = arith.maximumf %24, %25 : vector<8x16x64xf32>
    %27 = vector.extract_strided_slice %16 {offsets = [0, 0, 0], sizes = [1, 16, 64], strides = [1, 1, 1]} : vector<8x16x64xf32> to vector<1x16x64xf32>
    %28 = vector.shape_cast %27 : vector<1x16x64xf32> to vector<16x64xf32>
    %c1 = arith.constant 1 : index
    %c0_20 = arith.constant 0 : index
    %29 = vector.load %arg13[%c1, %c0_20] : memref<200x64xf32, #tpu.memory_space<vmem>>, vector<16x64xf32>
    tpu.vector_store %arg13[%c1, %c0_20], %28 {strides = array<i32>} : memref<200x64xf32, #tpu.memory_space<vmem>>, vector<16x64xf32>,
    %30 = vector.extract_strided_slice %26 {offsets = [0, 0, 0], sizes = [1, 16, 64], strides = [1, 1, 1]} : vector<8x16x64xf32> to vector<1x16x64xf32>
    %31 = vector.shape_cast %30 : vector<1x16x64xf32> to vector<16x64xf32>
    %c1_21 = arith.constant 1 : index
    %c0_22 = arith.constant 0 : index
    %32 = vector.load %arg14[%c1_21, %c0_22] : memref<200x64xf32, #tpu.memory_space<vmem>>, vector<16x64xf32>
    tpu.vector_store %arg14[%c1_21, %c0_22], %31 {strides = array<i32>} : memref<200x64xf32, #tpu.memory_space<vmem>>, vector<16x64xf32>,
    %33 = vector.extract_strided_slice %16 {offsets = [1, 0, 0], sizes = [1, 16, 64], strides = [1, 1, 1]} : vector<8x16x64xf32> to vector<1x16x64xf32>
    %34 = vector.shape_cast %33 : vector<1x16x64xf32> to vector<16x64xf32>
    %c25 = arith.constant 25 : index
    %c0_23 = arith.constant 0 : index
    %35 = vector.load %arg13[%c25, %c0_23] : memref<200x64xf32, #tpu.memory_space<vmem>>, vector<16x64xf32>
    tpu.vector_store %arg13[%c25, %c0_23], %34 {strides = array<i32>} : memref<200x64xf32, #tpu.memory_space<vmem>>, vector<16x64xf32>,
    %36 = vector.extract_strided_slice %26 {offsets = [1, 0, 0], sizes = [1, 16, 64], strides = [1, 1, 1]} : vector<8x16x64xf32> to vector<1x16x64xf32>
    %37 = vector.shape_cast %36 : vector<1x16x64xf32> to vector<16x64xf32>
    %c25_24 = arith.constant 25 : index
    %c0_25 = arith.constant 0 : index
    %38 = vector.load %arg14[%c25_24, %c0_25] : memref<200x64xf32, #tpu.memory_space<vmem>>, vector<16x64xf32>
    tpu.vector_store %arg14[%c25_24, %c0_25], %37 {strides = array<i32>} : memref<200x64xf32, #tpu.memory_space<vmem>>, vector<16x64xf32>,
    %39 = vector.extract_strided_slice %16 {offsets = [2, 0, 0], sizes = [1, 16, 64], strides = [1, 1, 1]} : vector<8x16x64xf32> to vector<1x16x64xf32>
    %40 = vector.shape_cast %39 : vector<1x16x64xf32> to vector<16x64xf32>
    %c49 = arith.constant 49 : index
    %c0_26 = arith.constant 0 : index
    %41 = vector.load %arg13[%c49, %c0_26] : memref<200x64xf32, #tpu.memory_space<vmem>>, vector<16x64xf32>
    tpu.vector_store %arg13[%c49, %c0_26], %40 {strides = array<i32>} : memref<200x64xf32, #tpu.memory_space<vmem>>, vector<16x64xf32>,
    %42 = vector.extract_strided_slice %26 {offsets = [2, 0, 0], sizes = [1, 16, 64], strides = [1, 1, 1]} : vector<8x16x64xf32> to vector<1x16x64xf32>
    %43 = vector.shape_cast %42 : vector<1x16x64xf32> to vector<16x64xf32>
    %c49_27 = arith.constant 49 : index
    %c0_28 = arith.constant 0 : index
    %44 = vector.load %arg14[%c49_27, %c0_28] : memref<200x64xf32, #tpu.memory_space<vmem>>, vector<16x64xf32>
    tpu.vector_store %arg14[%c49_27, %c0_28], %43 {strides = array<i32>} : memref<200x64xf32, #tpu.memory_space<vmem>>, vector<16x64xf32>,
    %45 = vector.extract_strided_slice %16 {offsets = [3, 0, 0], sizes = [1, 16, 64], strides = [1, 1, 1]} : vector<8x16x64xf32> to vector<1x16x64xf32>
    %46 = vector.shape_cast %45 : vector<1x16x64xf32> to vector<16x64xf32>
    %c73 = arith.constant 73 : index
    %c0_29 = arith.constant 0 : index
    %47 = vector.load %arg13[%c73, %c0_29] : memref<200x64xf32, #tpu.memory_space<vmem>>, vector<16x64xf32>
    tpu.vector_store %arg13[%c73, %c0_29], %46 {strides = array<i32>} : memref<200x64xf32, #tpu.memory_space<vmem>>, vector<16x64xf32>,
    %48 = vector.extract_strided_slice %26 {offsets = [3, 0, 0], sizes = [1, 16, 64], strides = [1, 1, 1]} : vector<8x16x64xf32> to vector<1x16x64xf32>
    %49 = vector.shape_cast %48 : vector<1x16x64xf32> to vector<16x64xf32>
    %c73_30 = arith.constant 73 : index
    %c0_31 = arith.constant 0 : index
    %50 = vector.load %arg14[%c73_30, %c0_31] : memref<200x64xf32, #tpu.memory_space<vmem>>, vector<16x64xf32>
    tpu.vector_store %arg14[%c73_30, %c0_31], %49 {strides = array<i32>} : memref<200x64xf32, #tpu.memory_space<vmem>>, vector<16x64xf32>,
    %51 = vector.extract_strided_slice %16 {offsets = [4, 0, 0], sizes = [1, 16, 64], strides = [1, 1, 1]} : vector<8x16x64xf32> to vector<1x16x64xf32>
    %52 = vector.shape_cast %51 : vector<1x16x64xf32> to vector<16x64xf32>
    %c97 = arith.constant 97 : index
    %c0_32 = arith.constant 0 : index
    %53 = vector.load %arg13[%c97, %c0_32] : memref<200x64xf32, #tpu.memory_space<vmem>>, vector<16x64xf32>
    tpu.vector_store %arg13[%c97, %c0_32], %52 {strides = array<i32>} : memref<200x64xf32, #tpu.memory_space<vmem>>, vector<16x64xf32>,
    %54 = vector.extract_strided_slice %26 {offsets = [4, 0, 0], sizes = [1, 16, 64], strides = [1, 1, 1]} : vector<8x16x64xf32> to vector<1x16x64xf32>
    %55 = vector.shape_cast %54 : vector<1x16x64xf32> to vector<16x64xf32>
    %c97_33 = arith.constant 97 : index
    %c0_34 = arith.constant 0 : index
    %56 = vector.load %arg14[%c97_33, %c0_34] : memref<200x64xf32, #tpu.memory_space<vmem>>, vector<16x64xf32>
    tpu.vector_store %arg14[%c97_33, %c0_34], %55 {strides = array<i32>} : memref<200x64xf32, #tpu.memory_space<vmem>>, vector<16x64xf32>,
    %57 = vector.extract_strided_slice %16 {offsets = [5, 0, 0], sizes = [1, 16, 64], strides = [1, 1, 1]} : vector<8x16x64xf32> to vector<1x16x64xf32>
    %58 = vector.shape_cast %57 : vector<1x16x64xf32> to vector<16x64xf32>
    %c121 = arith.constant 121 : index
    %c0_35 = arith.constant 0 : index
    %59 = vector.load %arg13[%c121, %c0_35] : memref<200x64xf32, #tpu.memory_space<vmem>>, vector<16x64xf32>
    tpu.vector_store %arg13[%c121, %c0_35], %58 {strides = array<i32>} : memref<200x64xf32, #tpu.memory_space<vmem>>, vector<16x64xf32>,
    %60 = vector.extract_strided_slice %26 {offsets = [5, 0, 0], sizes = [1, 16, 64], strides = [1, 1, 1]} : vector<8x16x64xf32> to vector<1x16x64xf32>
    %61 = vector.shape_cast %60 : vector<1x16x64xf32> to vector<16x64xf32>
    %c121_36 = arith.constant 121 : index
    %c0_37 = arith.constant 0 : index
    %62 = vector.load %arg14[%c121_36, %c0_37] : memref<200x64xf32, #tpu.memory_space<vmem>>, vector<16x64xf32>
    tpu.vector_store %arg14[%c121_36, %c0_37], %61 {strides = array<i32>} : memref<200x64xf32, #tpu.memory_space<vmem>>, vector<16x64xf32>,
    %63 = vector.extract_strided_slice %16 {offsets = [6, 0, 0], sizes = [1, 16, 64], strides = [1, 1, 1]} : vector<8x16x64xf32> to vector<1x16x64xf32>
    %64 = vector.shape_cast %63 : vector<1x16x64xf32> to vector<16x64xf32>
    %c145 = arith.constant 145 : index
    %c0_38 = arith.constant 0 : index
    %65 = vector.load %arg13[%c145, %c0_38] : memref<200x64xf32, #tpu.memory_space<vmem>>, vector<16x64xf32>
    tpu.vector_store %arg13[%c145, %c0_38], %64 {strides = array<i32>} : memref<200x64xf32, #tpu.memory_space<vmem>>, vector<16x64xf32>,
    %66 = vector.extract_strided_slice %26 {offsets = [6, 0, 0], sizes = [1, 16, 64], strides = [1, 1, 1]} : vector<8x16x64xf32> to vector<1x16x64xf32>
    %67 = vector.shape_cast %66 : vector<1x16x64xf32> to vector<16x64xf32>
    %c145_39 = arith.constant 145 : index
    %c0_40 = arith.constant 0 : index
    %68 = vector.load %arg14[%c145_39, %c0_40] : memref<200x64xf32, #tpu.memory_space<vmem>>, vector<16x64xf32>
    tpu.vector_store %arg14[%c145_39, %c0_40], %67 {strides = array<i32>} : memref<200x64xf32, #tpu.memory_space<vmem>>, vector<16x64xf32>,
    %69 = vector.extract_strided_slice %16 {offsets = [7, 0, 0], sizes = [1, 16, 64], strides = [1, 1, 1]} : vector<8x16x64xf32> to vector<1x16x64xf32>
    %70 = vector.shape_cast %69 : vector<1x16x64xf32> to vector<16x64xf32>
    %c169 = arith.constant 169 : index
    %c0_41 = arith.constant 0 : index
    %71 = vector.load %arg13[%c169, %c0_41] : memref<200x64xf32, #tpu.memory_space<vmem>>, vector<16x64xf32>
    tpu.vector_store %arg13[%c169, %c0_41], %70 {strides = array<i32>} : memref<200x64xf32, #tpu.memory_space<vmem>>, vector<16x64xf32>,
    %72 = vector.extract_strided_slice %26 {offsets = [7, 0, 0], sizes = [1, 16, 64], strides = [1, 1, 1]} : vector<8x16x64xf32> to vector<1x16x64xf32>
    %73 = vector.shape_cast %72 : vector<1x16x64xf32> to vector<16x64xf32>
    %c169_42 = arith.constant 169 : index
    %c0_43 = arith.constant 0 : index
    %74 = vector.load %arg14[%c169_42, %c0_43] : memref<200x64xf32, #tpu.memory_space<vmem>>, vector<16x64xf32>
    tpu.vector_store %arg14[%c169_42, %c0_43], %73 {strides = array<i32>} : memref<200x64xf32, #tpu.memory_space<vmem>>, vector<16x64xf32>,
    %c0_44 = arith.constant 0 : index
    %c0_45 = arith.constant 0 : index
    %75 = vector.load %arg14[%c0_44, %c0_45] : memref<200x64xf32, #tpu.memory_space<vmem>>, vector<192x64xf32>
    %76 = arith.truncf %75 : vector<192x64xf32> to vector<192x64xbf16>
    %c0_46 = arith.constant 0 : index
    %c0_47 = arith.constant 0 : index
    %c0_48 = arith.constant 0 : index
    %77 = vector.load %arg10[%c0_46, %c0_47, %c0_48] : memref<3x64x128xbf16, #tpu.memory_space<vmem>>, vector<1x64x128xbf16>
    %78 = vector.shape_cast %77 : vector<1x64x128xbf16> to vector<64x128xbf16>
    %cst_49 = arith.constant dense<0.000000e+00> : vector<192x128xf32>
    %79 = tpu.matmul %76, %78, %cst_49 {dimension_numbers = #tpu.dot_dimension_numbers<[1], [0], [0], [1], [0, 0, 1, 1], [], []>} : vector<192x64xbf16>, vector<64x128xbf16>, vector<192x128xf32> -> vector<192x128xf32>
    %c1_50 = arith.constant 1 : index
    %c0_51 = arith.constant 0 : index
    %80 = vector.load %arg14[%c1_50, %c0_51] : memref<200x64xf32, #tpu.memory_space<vmem>>, vector<192x64xf32>
    %81 = arith.truncf %80 : vector<192x64xf32> to vector<192x64xbf16>
    %c1_52 = arith.constant 1 : index
    %c0_53 = arith.constant 0 : index
    %c0_54 = arith.constant 0 : index
    %82 = vector.load %arg10[%c1_52, %c0_53, %c0_54] : memref<3x64x128xbf16, #tpu.memory_space<vmem>>, vector<1x64x128xbf16>
    %83 = vector.shape_cast %82 : vector<1x64x128xbf16> to vector<64x128xbf16>
    %cst_55 = arith.constant dense<0.000000e+00> : vector<192x128xf32>
    %84 = tpu.matmul %81, %83, %cst_55 {dimension_numbers = #tpu.dot_dimension_numbers<[1], [0], [0], [1], [0, 0, 1, 1], [], []>} : vector<192x64xbf16>, vector<64x128xbf16>, vector<192x128xf32> -> vector<192x128xf32>
    %85 = arith.addf %79, %84 : vector<192x128xf32>
    %c2 = arith.constant 2 : index
    %c0_56 = arith.constant 0 : index
    %86 = vector.load %arg14[%c2, %c0_56] : memref<200x64xf32, #tpu.memory_space<vmem>>, vector<192x64xf32>
    %87 = arith.truncf %86 : vector<192x64xf32> to vector<192x64xbf16>
    %c2_57 = arith.constant 2 : index
    %c0_58 = arith.constant 0 : index
    %c0_59 = arith.constant 0 : index
    %88 = vector.load %arg10[%c2_57, %c0_58, %c0_59] : memref<3x64x128xbf16, #tpu.memory_space<vmem>>, vector<1x64x128xbf16>
    %89 = vector.shape_cast %88 : vector<1x64x128xbf16> to vector<64x128xbf16>
    %cst_60 = arith.constant dense<0.000000e+00> : vector<192x128xf32>
    %90 = tpu.matmul %87, %89, %cst_60 {dimension_numbers = #tpu.dot_dimension_numbers<[1], [0], [0], [1], [0, 0, 1, 1], [], []>} : vector<192x64xbf16>, vector<64x128xbf16>, vector<192x128xf32> -> vector<192x128xf32>
    %91 = arith.addf %85, %90 : vector<192x128xf32>
    %92 = vector.shape_cast %91 : vector<192x128xf32> to vector<8x24x128xf32>
    %93 = vector.extract_strided_slice %92 {offsets = [0, 0, 0], sizes = [8, 16, 128], strides = [1, 1, 1]} : vector<8x24x128xf32> to vector<8x16x128xf32>
    %c0_61 = arith.constant 0 : index
    %c0_62 = arith.constant 0 : index
    %94 = vector.load %arg11[%c0_61, %c0_62] : memref<1x128xf32, #tpu.memory_space<vmem>>, vector<1x128xf32>
    %95 = vector.shape_cast %94 : vector<1x128xf32> to vector<1x1x128xf32>
    %96 = vector.broadcast %95 : vector<1x1x128xf32> to vector<8x16x128xf32>
    %97 = arith.addf %93, %96 : vector<8x16x128xf32>
    %c0_63 = arith.constant 0 : index
    %c0_64 = arith.constant 0 : index
    %c0_65 = arith.constant 0 : index
    %98 = vector.load %arg12[%c0_63, %c0_64, %c0_65] : memref<8x16x128xf32, #tpu.memory_space<vmem>>, vector<8x16x128xf32>
    tpu.vector_store %arg12[%c0_63, %c0_64, %c0_65], %97 {strides = array<i32>} : memref<8x16x128xf32, #tpu.memory_space<vmem>>, vector<8x16x128xf32>,
    %c0_66 = arith.constant 0 : index
    %c0_67 = arith.constant 0 : index
    %99 = vector.load %arg13[%c0_66, %c0_67] : memref<200x64xf32, #tpu.memory_space<vmem>>, vector<192x64xf32>
    %100 = arith.truncf %99 : vector<192x64xf32> to vector<192x64xbf16>
    %c0_68 = arith.constant 0 : index
    %c0_69 = arith.constant 0 : index
    %c0_70 = arith.constant 0 : index
    %101 = vector.load %arg8[%c0_68, %c0_69, %c0_70] : memref<3x64x128xbf16, #tpu.memory_space<vmem>>, vector<1x64x128xbf16>
    %102 = vector.shape_cast %101 : vector<1x64x128xbf16> to vector<64x128xbf16>
    %cst_71 = arith.constant dense<0.000000e+00> : vector<192x128xf32>
    %103 = tpu.matmul %100, %102, %cst_71 {dimension_numbers = #tpu.dot_dimension_numbers<[1], [0], [0], [1], [0, 0, 1, 1], [], []>} : vector<192x64xbf16>, vector<64x128xbf16>, vector<192x128xf32> -> vector<192x128xf32>
    %c1_72 = arith.constant 1 : index
    %c0_73 = arith.constant 0 : index
    %104 = vector.load %arg13[%c1_72, %c0_73] : memref<200x64xf32, #tpu.memory_space<vmem>>, vector<192x64xf32>
    %105 = arith.truncf %104 : vector<192x64xf32> to vector<192x64xbf16>
    %c1_74 = arith.constant 1 : index
    %c0_75 = arith.constant 0 : index
    %c0_76 = arith.constant 0 : index
    %106 = vector.load %arg8[%c1_74, %c0_75, %c0_76] : memref<3x64x128xbf16, #tpu.memory_space<vmem>>, vector<1x64x128xbf16>
    %107 = vector.shape_cast %106 : vector<1x64x128xbf16> to vector<64x128xbf16>
    %cst_77 = arith.constant dense<0.000000e+00> : vector<192x128xf32>
    %108 = tpu.matmul %105, %107, %cst_77 {dimension_numbers = #tpu.dot_dimension_numbers<[1], [0], [0], [1], [0, 0, 1, 1], [], []>} : vector<192x64xbf16>, vector<64x128xbf16>, vector<192x128xf32> -> vector<192x128xf32>
    %109 = arith.addf %103, %108 : vector<192x128xf32>
    %c2_78 = arith.constant 2 : index
    %c0_79 = arith.constant 0 : index
    %110 = vector.load %arg13[%c2_78, %c0_79] : memref<200x64xf32, #tpu.memory_space<vmem>>, vector<192x64xf32>
    %111 = arith.truncf %110 : vector<192x64xf32> to vector<192x64xbf16>
    %c2_80 = arith.constant 2 : index
    %c0_81 = arith.constant 0 : index
    %c0_82 = arith.constant 0 : index
    %112 = vector.load %arg8[%c2_80, %c0_81, %c0_82] : memref<3x64x128xbf16, #tpu.memory_space<vmem>>, vector<1x64x128xbf16>
    %113 = vector.shape_cast %112 : vector<1x64x128xbf16> to vector<64x128xbf16>
    %cst_83 = arith.constant dense<0.000000e+00> : vector<192x128xf32>
    %114 = tpu.matmul %111, %113, %cst_83 {dimension_numbers = #tpu.dot_dimension_numbers<[1], [0], [0], [1], [0, 0, 1, 1], [], []>} : vector<192x64xbf16>, vector<64x128xbf16>, vector<192x128xf32> -> vector<192x128xf32>
    %115 = arith.addf %109, %114 : vector<192x128xf32>
    %116 = vector.shape_cast %115 : vector<192x128xf32> to vector<8x24x128xf32>
    %117 = vector.extract_strided_slice %116 {offsets = [0, 0, 0], sizes = [8, 16, 128], strides = [1, 1, 1]} : vector<8x24x128xf32> to vector<8x16x128xf32>
    %c0_84 = arith.constant 0 : index
    %c0_85 = arith.constant 0 : index
    %118 = vector.load %arg4[%c0_84, %c0_85] : memref<1x128xf32, #tpu.memory_space<vmem>>, vector<1x128xf32>
    %119 = vector.shape_cast %118 : vector<1x128xf32> to vector<1x1x128xf32>
    %120 = vector.broadcast %119 : vector<1x1x128xf32> to vector<8x16x128xf32>
    %121 = arith.mulf %117, %120 : vector<8x16x128xf32>
    %c0_86 = arith.constant 0 : index
    %c0_87 = arith.constant 0 : index
    %122 = vector.load %arg5[%c0_86, %c0_87] : memref<1x128xf32, #tpu.memory_space<vmem>>, vector<1x128xf32>
    %123 = vector.shape_cast %122 : vector<1x128xf32> to vector<1x1x128xf32>
    %124 = vector.broadcast %123 : vector<1x1x128xf32> to vector<8x16x128xf32>
    %125 = arith.addf %121, %124 : vector<8x16x128xf32>
    %cst_88 = arith.constant 0.000000e+00 : f32
    %126 = vector.broadcast %cst_88 : f32 to vector<8x16x128xf32>
    %127 = arith.maximumf %125, %126 : vector<8x16x128xf32>
    %128 = vector.extract_strided_slice %127 {offsets = [0, 0, 0], sizes = [1, 16, 128], strides = [1, 1, 1]} : vector<8x16x128xf32> to vector<1x16x128xf32>
    %129 = vector.shape_cast %128 : vector<1x16x128xf32> to vector<16x128xf32>
    %c1_89 = arith.constant 1 : index
    %c0_90 = arith.constant 0 : index
    %130 = vector.load %arg15[%c1_89, %c0_90] : memref<200x128xf32, #tpu.memory_space<vmem>>, vector<16x128xf32>
    tpu.vector_store %arg15[%c1_89, %c0_90], %129 {strides = array<i32>} : memref<200x128xf32, #tpu.memory_space<vmem>>, vector<16x128xf32>,
    %131 = vector.extract_strided_slice %127 {offsets = [1, 0, 0], sizes = [1, 16, 128], strides = [1, 1, 1]} : vector<8x16x128xf32> to vector<1x16x128xf32>
    %132 = vector.shape_cast %131 : vector<1x16x128xf32> to vector<16x128xf32>
    %c25_91 = arith.constant 25 : index
    %c0_92 = arith.constant 0 : index
    %133 = vector.load %arg15[%c25_91, %c0_92] : memref<200x128xf32, #tpu.memory_space<vmem>>, vector<16x128xf32>
    tpu.vector_store %arg15[%c25_91, %c0_92], %132 {strides = array<i32>} : memref<200x128xf32, #tpu.memory_space<vmem>>, vector<16x128xf32>,
    %134 = vector.extract_strided_slice %127 {offsets = [2, 0, 0], sizes = [1, 16, 128], strides = [1, 1, 1]} : vector<8x16x128xf32> to vector<1x16x128xf32>
    %135 = vector.shape_cast %134 : vector<1x16x128xf32> to vector<16x128xf32>
    %c49_93 = arith.constant 49 : index
    %c0_94 = arith.constant 0 : index
    %136 = vector.load %arg15[%c49_93, %c0_94] : memref<200x128xf32, #tpu.memory_space<vmem>>, vector<16x128xf32>
    tpu.vector_store %arg15[%c49_93, %c0_94], %135 {strides = array<i32>} : memref<200x128xf32, #tpu.memory_space<vmem>>, vector<16x128xf32>,
    %137 = vector.extract_strided_slice %127 {offsets = [3, 0, 0], sizes = [1, 16, 128], strides = [1, 1, 1]} : vector<8x16x128xf32> to vector<1x16x128xf32>
    %138 = vector.shape_cast %137 : vector<1x16x128xf32> to vector<16x128xf32>
    %c73_95 = arith.constant 73 : index
    %c0_96 = arith.constant 0 : index
    %139 = vector.load %arg15[%c73_95, %c0_96] : memref<200x128xf32, #tpu.memory_space<vmem>>, vector<16x128xf32>
    tpu.vector_store %arg15[%c73_95, %c0_96], %138 {strides = array<i32>} : memref<200x128xf32, #tpu.memory_space<vmem>>, vector<16x128xf32>,
    %140 = vector.extract_strided_slice %127 {offsets = [4, 0, 0], sizes = [1, 16, 128], strides = [1, 1, 1]} : vector<8x16x128xf32> to vector<1x16x128xf32>
    %141 = vector.shape_cast %140 : vector<1x16x128xf32> to vector<16x128xf32>
    %c97_97 = arith.constant 97 : index
    %c0_98 = arith.constant 0 : index
    %142 = vector.load %arg15[%c97_97, %c0_98] : memref<200x128xf32, #tpu.memory_space<vmem>>, vector<16x128xf32>
    tpu.vector_store %arg15[%c97_97, %c0_98], %141 {strides = array<i32>} : memref<200x128xf32, #tpu.memory_space<vmem>>, vector<16x128xf32>,
    %143 = vector.extract_strided_slice %127 {offsets = [5, 0, 0], sizes = [1, 16, 128], strides = [1, 1, 1]} : vector<8x16x128xf32> to vector<1x16x128xf32>
    %144 = vector.shape_cast %143 : vector<1x16x128xf32> to vector<16x128xf32>
    %c121_99 = arith.constant 121 : index
    %c0_100 = arith.constant 0 : index
    %145 = vector.load %arg15[%c121_99, %c0_100] : memref<200x128xf32, #tpu.memory_space<vmem>>, vector<16x128xf32>
    tpu.vector_store %arg15[%c121_99, %c0_100], %144 {strides = array<i32>} : memref<200x128xf32, #tpu.memory_space<vmem>>, vector<16x128xf32>,
    %146 = vector.extract_strided_slice %127 {offsets = [6, 0, 0], sizes = [1, 16, 128], strides = [1, 1, 1]} : vector<8x16x128xf32> to vector<1x16x128xf32>
    %147 = vector.shape_cast %146 : vector<1x16x128xf32> to vector<16x128xf32>
    %c145_101 = arith.constant 145 : index
    %c0_102 = arith.constant 0 : index
    %148 = vector.load %arg15[%c145_101, %c0_102] : memref<200x128xf32, #tpu.memory_space<vmem>>, vector<16x128xf32>
    tpu.vector_store %arg15[%c145_101, %c0_102], %147 {strides = array<i32>} : memref<200x128xf32, #tpu.memory_space<vmem>>, vector<16x128xf32>,
    %149 = vector.extract_strided_slice %127 {offsets = [7, 0, 0], sizes = [1, 16, 128], strides = [1, 1, 1]} : vector<8x16x128xf32> to vector<1x16x128xf32>
    %150 = vector.shape_cast %149 : vector<1x16x128xf32> to vector<16x128xf32>
    %c169_103 = arith.constant 169 : index
    %c0_104 = arith.constant 0 : index
    %151 = vector.load %arg15[%c169_103, %c0_104] : memref<200x128xf32, #tpu.memory_space<vmem>>, vector<16x128xf32>
    tpu.vector_store %arg15[%c169_103, %c0_104], %150 {strides = array<i32>} : memref<200x128xf32, #tpu.memory_space<vmem>>, vector<16x128xf32>,
    %c0_105 = arith.constant 0 : index
    %c0_106 = arith.constant 0 : index
    %152 = vector.load %arg15[%c0_105, %c0_106] : memref<200x128xf32, #tpu.memory_space<vmem>>, vector<192x128xf32>
    %153 = arith.truncf %152 : vector<192x128xf32> to vector<192x128xbf16>
    %c0_107 = arith.constant 0 : index
    %c0_108 = arith.constant 0 : index
    %c0_109 = arith.constant 0 : index
    %154 = vector.load %arg9[%c0_107, %c0_108, %c0_109] : memref<3x128x128xbf16, #tpu.memory_space<vmem>>, vector<1x128x128xbf16>
    %155 = vector.shape_cast %154 : vector<1x128x128xbf16> to vector<128x128xbf16>
    %cst_110 = arith.constant dense<0.000000e+00> : vector<192x128xf32>
    %156 = tpu.matmul %153, %155, %cst_110 {dimension_numbers = #tpu.dot_dimension_numbers<[1], [0], [0], [1], [0, 0, 1, 1], [], []>} : vector<192x128xbf16>, vector<128x128xbf16>, vector<192x128xf32> -> vector<192x128xf32>
    %c1_111 = arith.constant 1 : index
    %c0_112 = arith.constant 0 : index
    %157 = vector.load %arg15[%c1_111, %c0_112] : memref<200x128xf32, #tpu.memory_space<vmem>>, vector<192x128xf32>
    %158 = arith.truncf %157 : vector<192x128xf32> to vector<192x128xbf16>
    %c1_113 = arith.constant 1 : index
    %c0_114 = arith.constant 0 : index
    %c0_115 = arith.constant 0 : index
    %159 = vector.load %arg9[%c1_113, %c0_114, %c0_115] : memref<3x128x128xbf16, #tpu.memory_space<vmem>>, vector<1x128x128xbf16>
    %160 = vector.shape_cast %159 : vector<1x128x128xbf16> to vector<128x128xbf16>
    %cst_116 = arith.constant dense<0.000000e+00> : vector<192x128xf32>
    %161 = tpu.matmul %158, %160, %cst_116 {dimension_numbers = #tpu.dot_dimension_numbers<[1], [0], [0], [1], [0, 0, 1, 1], [], []>} : vector<192x128xbf16>, vector<128x128xbf16>, vector<192x128xf32> -> vector<192x128xf32>
    %162 = arith.addf %156, %161 : vector<192x128xf32>
    %c2_117 = arith.constant 2 : index
    %c0_118 = arith.constant 0 : index
    %163 = vector.load %arg15[%c2_117, %c0_118] : memref<200x128xf32, #tpu.memory_space<vmem>>, vector<192x128xf32>
    %164 = arith.truncf %163 : vector<192x128xf32> to vector<192x128xbf16>
    %c2_119 = arith.constant 2 : index
    %c0_120 = arith.constant 0 : index
    %c0_121 = arith.constant 0 : index
    %165 = vector.load %arg9[%c2_119, %c0_120, %c0_121] : memref<3x128x128xbf16, #tpu.memory_space<vmem>>, vector<1x128x128xbf16>
    %166 = vector.shape_cast %165 : vector<1x128x128xbf16> to vector<128x128xbf16>
    %cst_122 = arith.constant dense<0.000000e+00> : vector<192x128xf32>
    %167 = tpu.matmul %164, %166, %cst_122 {dimension_numbers = #tpu.dot_dimension_numbers<[1], [0], [0], [1], [0, 0, 1, 1], [], []>} : vector<192x128xbf16>, vector<128x128xbf16>, vector<192x128xf32> -> vector<192x128xf32>
    %168 = arith.addf %162, %167 : vector<192x128xf32>
    %c0_123 = arith.constant 0 : index
    %c0_124 = arith.constant 0 : index
    %c0_125 = arith.constant 0 : index
    %169 = vector.load %arg12[%c0_123, %c0_124, %c0_125] : memref<8x16x128xf32, #tpu.memory_space<vmem>>, vector<8x16x128xf32>
    %170 = vector.shape_cast %168 : vector<192x128xf32> to vector<8x24x128xf32>
    %171 = vector.extract_strided_slice %170 {offsets = [0, 0, 0], sizes = [8, 16, 128], strides = [1, 1, 1]} : vector<8x24x128xf32> to vector<8x16x128xf32>
    %172 = arith.addf %169, %171 : vector<8x16x128xf32>
    %c0_126 = arith.constant 0 : index
    %c0_127 = arith.constant 0 : index
    %c0_128 = arith.constant 0 : index
    %173 = vector.load %arg12[%c0_126, %c0_127, %c0_128] : memref<8x16x128xf32, #tpu.memory_space<vmem>>, vector<8x16x128xf32>
    tpu.vector_store %arg12[%c0_126, %c0_127, %c0_128], %172 {strides = array<i32>} : memref<8x16x128xf32, #tpu.memory_space<vmem>>, vector<8x16x128xf32>,
    return
  }
  func.func @transform_0(%arg0: i32) -> (i32, i32, i32) {
    %c0_i32 = arith.constant 0 : i32
    %c0_i32_0 = arith.constant 0 : i32
    %c0_i32_1 = arith.constant 0 : i32
    return %arg0, %c0_i32, %c0_i32_0 : i32, i32, i32
  }
  func.func @transform_1(%arg0: i32) -> (i32, i32) {
    %c0_i32 = arith.constant 0 : i32
    %c0_i32_0 = arith.constant 0 : i32
    %c0_i32_1 = arith.constant 0 : i32
    return %c0_i32, %c0_i32_0 : i32, i32
  }
  func.func @transform_2(%arg0: i32) -> (i32, i32) {
    %c0_i32 = arith.constant 0 : i32
    %c0_i32_0 = arith.constant 0 : i32
    %c0_i32_1 = arith.constant 0 : i32
    return %c0_i32, %c0_i32_0 : i32, i32
  }
  func.func @transform_3(%arg0: i32) -> (i32, i32) {
    %c0_i32 = arith.constant 0 : i32
    %c0_i32_0 = arith.constant 0 : i32
    %c0_i32_1 = arith.constant 0 : i32
    return %c0_i32, %c0_i32_0 : i32, i32
  }
  func.func @transform_4(%arg0: i32) -> (i32, i32) {
    %c0_i32 = arith.constant 0 : i32
    %c0_i32_0 = arith.constant 0 : i32
    %c0_i32_1 = arith.constant 0 : i32
    return %c0_i32, %c0_i32_0 : i32, i32
  }
  func.func @transform_5(%arg0: i32) -> (i32, i32) {
    %c0_i32 = arith.constant 0 : i32
    %c0_i32_0 = arith.constant 0 : i32
    %c0_i32_1 = arith.constant 0 : i32
    return %c0_i32, %c0_i32_0 : i32, i32
  }
  func.func @transform_6(%arg0: i32) -> (i32, i32) {
    %c0_i32 = arith.constant 0 : i32
    %c0_i32_0 = arith.constant 0 : i32
    %c0_i32_1 = arith.constant 0 : i32
    return %c0_i32, %c0_i32_0 : i32, i32
  }
  func.func @transform_7(%arg0: i32) -> (i32, i32, i32) {
    %c0_i32 = arith.constant 0 : i32
    %c0_i32_0 = arith.constant 0 : i32
    %c0_i32_1 = arith.constant 0 : i32
    %c0_i32_2 = arith.constant 0 : i32
    return %c0_i32, %c0_i32_0, %c0_i32_1 : i32, i32, i32
  }
  func.func @transform_8(%arg0: i32) -> (i32, i32, i32) {
    %c0_i32 = arith.constant 0 : i32
    %c0_i32_0 = arith.constant 0 : i32
    %c0_i32_1 = arith.constant 0 : i32
    %c0_i32_2 = arith.constant 0 : i32
    return %c0_i32, %c0_i32_0, %c0_i32_1 : i32, i32, i32
  }
  func.func @transform_9(%arg0: i32) -> (i32, i32, i32) {
    %c0_i32 = arith.constant 0 : i32
    %c0_i32_0 = arith.constant 0 : i32
    %c0_i32_1 = arith.constant 0 : i32
    %c0_i32_2 = arith.constant 0 : i32
    return %c0_i32, %c0_i32_0, %c0_i32_1 : i32, i32, i32
  }
  func.func @transform_10(%arg0: i32) -> (i32, i32) {
    %c0_i32 = arith.constant 0 : i32
    %c0_i32_0 = arith.constant 0 : i32
    %c0_i32_1 = arith.constant 0 : i32
    return %c0_i32, %c0_i32_0 : i32, i32
  }
  func.func @transform_11(%arg0: i32) -> (i32, i32, i32) {
    %c0_i32 = arith.constant 0 : i32
    %c0_i32_0 = arith.constant 0 : i32
    %c0_i32_1 = arith.constant 0 : i32
    return %arg0, %c0_i32, %c0_i32_0 : i32, i32, i32
  }
}

</mosaic_0001>

<llo_original>
// kernel: tpu_custom_call.1
$region0: #{tpu_custom_call.1}
  #allocation0 [shape = 'u32[]', space=smem, size = 0x4, offset = 0x4, fixed_abs, tag = 'smem constant byte address 0x4 - core index']
  #allocation1 [shape = 'u32[72,128]{1,0:T(1,128)}', space=vmem, size = 0x9000, scoped, tag = 'internal scratch']
  #allocation2 [shape = 'f32[200,64]{1,0:T(8,128)}', space=vmem, size = 0x19000, scoped, tag = 'scratch operand']
  #allocation3 [shape = 'f32[200,64]{1,0:T(8,128)}', space=vmem, size = 0x19000, scoped, tag = 'scratch operand']
  #allocation4 [shape = 'f32[200,128]{1,0:T(8,128)}', space=vmem, size = 0x19000, scoped, tag = 'scratch operand']
  %s0 = inlined_call_operand.hbm [shape: f32[16,16,64], index: 0, kind: input, shape index: {}]
  %s1 = inlined_call_operand.hbm [shape: f32[1,64], index: 1, kind: input, shape index: {}]
  %s2 = inlined_call_operand.vmem [shape: f32[1,64], index: 2, kind: input, shape index: {}]
  %s3 = inlined_call_operand.vmem [shape: f32[1,128], index: 3, kind: input, shape index: {}]
  %s4 = inlined_call_operand.vmem [shape: f32[1,128], index: 4, kind: input, shape index: {}]
  %s5 = inlined_call_operand.vmem [shape: f32[1,64], index: 5, kind: input, shape index: {}]
  %s6 = inlined_call_operand.vmem [shape: f32[1,64], index: 6, kind: input, shape index: {}]
  %s7 = inlined_call_operand.hbm [shape: bf16[3,64,128], index: 7, kind: input, shape index: {}]
  %s8 = inlined_call_operand.hbm [shape: bf16[3,128,128], index: 8, kind: input, shape index: {}]
  %s9 = inlined_call_operand.hbm [shape: bf16[3,64,128], index: 9, kind: input, shape index: {}]
  %s10 = inlined_call_operand.vmem [shape: f32[1,128], index: 10, kind: input, shape index: {}]
  %s11 = inlined_call_operand.hbm [shape: f32[16,16,128], index: 11, kind: output, shape index: {}]
  %s12 = sld [smem:[#allocation0]]
  $region97: #{tpu_custom_call.1} parent=0
    _
  %s14 = ssub.s32 1, %s12
  %s15 = scalar_select 0, %s14, %s12
  $region1: #{tpu_custom_call.1} parent=0
    #allocation5 [shape = 'u8[131072]{0}', space=vmem, size = 0x20000, scoped, tag = 'input window, operand 0']
    #allocation6 [shape = 's32[2]{0}', space=sflag, size = 0x8, scoped, tag = 'scoped memory for tpu_custom_call.1']
    #allocation7 [shape = 's32[2]{0}', space=sflag, size = 0x8, scoped, tag = 'scoped memory for tpu_custom_call.1']
    #allocation8 [shape = 'u8[512]{0}', space=vmem, size = 0x400, scoped, tag = 'input window, operand 1, single buffered']
    #allocation9 [shape = 's32[1]{0}', space=sflag, size = 0x4, scoped, tag = 'scoped memory for tpu_custom_call.1']
    #allocation10 [shape = 'u8[49152]{0}', space=vmem, size = 0xc000, scoped, tag = 'input window, operand 7, single buffered']
    #allocation11 [shape = 'u8[98304]{0}', space=vmem, size = 0x18000, scoped, tag = 'input window, operand 8, single buffered']
    #allocation12 [shape = 's32[1]{0}', space=sflag, size = 0x4, scoped, tag = 'scoped memory for tpu_custom_call.1']
    #allocation13 [shape = 'u8[49152]{0}', space=vmem, size = 0xc000, scoped, tag = 'input window, operand 9, single buffered']
    #allocation14 [shape = 'u8[131072]{0}', space=vmem, size = 0x20000, scoped, tag = 'output window, operand 0']
    %16 = vsyncpa [#allocation6], 0
    %s17 = scalar_lea.sflag [#allocation6], 1
    %18 = vsyncpa %s17, 0
    %19 = vsyncpa [#allocation9], 0
    %20 = vsyncpa [#allocation12], 0
    %21 = vsyncpa [#allocation7], 0
    %s22 = scalar_lea.sflag [#allocation7], 1
    %23 = vsyncpa %s22, 0
    loop: start=0, step=1, limit=4
    $region2: #{tpu_custom_call.1} parent=1 // loop_pre_header
      _
    $region3: #{tpu_custom_call.1} parent=1 // loop_header
      %s25 = sphi 0, %s29
      %p26 = scmp.ge.s32.totalorder %s25, 4
      %s35 = sphi 0, %s37
      %s38 = sphi 0, %s35
      %s39 = sphi 0, %s38
      %s55 = sphi 0, %s39
      %s59 = sphi 0, %s59
      %s61 = sphi 0, %s59
      %s62 = sphi 0, %s61
      %s76 = sphi 0, %s62
      %s80 = sphi 0, %s80
      %s82 = sphi 0, %s80
      %s83 = sphi 0, %s82
      %s97 = sphi 0, %s83
      %s101 = sphi 0, %s101
      %s103 = sphi 0, %s101
      %s104 = sphi 0, %s103
      %s118 = sphi 0, %s104
      %s122 = sphi 0, %s122
      %s124 = sphi 0, %s122
      %s125 = sphi 0, %s124
      %s139 = sphi 0, %s125
      %s143 = sphi 0, %s143
      %s145 = sphi 0, %s143
      %s146 = sphi 0, %s145
      %s160 = sphi 0, %s146
      %s164 = sphi 0, %s164
      %s166 = sphi 0, %s164
      %s167 = sphi 0, %s166
      %s181 = sphi 0, %s167
      %s185 = sphi 0, %s185
      %s187 = sphi 0, %s185
      %s188 = sphi 0, %s187
      %s202 = sphi 0, %s188
      %s206 = sphi 0, %s206
      %s208 = sphi 0, %s206
      %s209 = sphi 0, %s208
      %s223 = sphi 0, %s209
      %s227 = sphi 0, %s227
      %s229 = sphi 0, %s227
      %s230 = sphi 0, %s229
      %s244 = sphi 0, %s230
      %s248 = sphi 0, %s248
      %s250 = sphi 0, %s248
      %s251 = sphi 0, %s250
      %s265 = sphi 0, %s251
      %s271 = sphi 0, %s273
      %s274 = sphi 0, %s271
      %s275 = sphi 0, %s274
      %s291 = sphi 0, %s275
    $region4: #{tpu_custom_call.1} parent=1 // loop_header_branch
      %28 = sbr.rel (%p26) target = $region8
    $region5: #{tpu_custom_call.1} parent=1 // loop_body
      %s30 = ssub.s32 %s25, 1
      %s31 = ssub.s32 %s25, 2
      %s32 = sadd.s32 %s25, 1
      %s33 = ssub.s32 %s25, %s32
      %p34 = scmp.eq.s32.totalorder %s33, 0
      %s36 = sadd.s32 %s35, 1
      %s37 = scalar_select %p34, %s35, %s36
      %p40 = pneg %p34
      %p41 = scmp.eq.s32.totalorder %s25, 1
      %p42 = por %p40, %p41
      %p43 = scmp.ne.s32.totalorder %s35, %s38
      %p44 = scmp.eq.s32.totalorder %s25, 0
      %p45 = por %p43, %p44
      %p46 = scmp.ne.s32.totalorder %s35, %s38
      %p47 = scmp.eq.s32.totalorder %s30, 1
      %p48 = por %p46, %p47
      %p49 = scmp.ne.s32.totalorder %s38, %s39
      %p50 = scmp.eq.s32.totalorder %s30, 0
      %p51 = por %p49, %p50
      %p52 = scmp.ne.s32.totalorder %s38, %s39
      %p53 = scmp.eq.s32.totalorder %s31, 1
      %p54 = por %p52, %p53
      %p56 = scmp.ne.s32.totalorder %s39, %s55
      %p57 = scmp.eq.s32.totalorder %s31, 0
      %p58 = por %p56, %p57
      %s60 = sadd.s32 %s59, 1
      %p63 = scmp.eq.s32.totalorder %s25, 1
      %p64 = scmp.ne.s32.totalorder %s59, %s61
      %p65 = scmp.eq.s32.totalorder %s25, 0
      %p66 = por %p64, %p65
      %p67 = scmp.ne.s32.totalorder %s59, %s61
      %p68 = scmp.eq.s32.totalorder %s30, 1
      %p69 = por %p67, %p68
      %p70 = scmp.ne.s32.totalorder %s61, %s62
      %p71 = scmp.eq.s32.totalorder %s30, 0
      %p72 = por %p70, %p71
      %p73 = scmp.ne.s32.totalorder %s61, %s62
      %p74 = scmp.eq.s32.totalorder %s31, 1
      %p75 = por %p73, %p74
      %p77 = scmp.ne.s32.totalorder %s62, %s76
      %p78 = scmp.eq.s32.totalorder %s31, 0
      %p79 = por %p77, %p78
      %s81 = sadd.s32 %s80, 1
      %p84 = scmp.eq.s32.totalorder %s25, 1
      %p85 = scmp.ne.s32.totalorder %s80, %s82
      %p86 = scmp.eq.s32.totalorder %s25, 0
      %p87 = por %p85, %p86
      %p88 = scmp.ne.s32.totalorder %s80, %s82
      %p89 = scmp.eq.s32.totalorder %s30, 1
      %p90 = por %p88, %p89
      %p91 = scmp.ne.s32.totalorder %s82, %s83
      %p92 = scmp.eq.s32.totalorder %s30, 0
      %p93 = por %p91, %p92
      %p94 = scmp.ne.s32.totalorder %s82, %s83
      %p95 = scmp.eq.s32.totalorder %s31, 1
      %p96 = por %p94, %p95
      %p98 = scmp.ne.s32.totalorder %s83, %s97
      %p99 = scmp.eq.s32.totalorder %s31, 0
      %p100 = por %p98, %p99
      %s102 = sadd.s32 %s101, 1
      %p105 = scmp.eq.s32.totalorder %s25, 1
      %p106 = scmp.ne.s32.totalorder %s101, %s103
      %p107 = scmp.eq.s32.totalorder %s25, 0
      %p108 = por %p106, %p107
      %p109 = scmp.ne.s32.totalorder %s101, %s103
      %p110 = scmp.eq.s32.totalorder %s30, 1
      %p111 = por %p109, %p110
      %p112 = scmp.ne.s32.totalorder %s103, %s104
      %p113 = scmp.eq.s32.totalorder %s30, 0
      %p114 = por %p112, %p113
      %p115 = scmp.ne.s32.totalorder %s103, %s104
      %p116 = scmp.eq.s32.totalorder %s31, 1
      %p117 = por %p115, %p116
      %p119 = scmp.ne.s32.totalorder %s104, %s118
      %p120 = scmp.eq.s32.totalorder %s31, 0
      %p121 = por %p119, %p120
      %s123 = sadd.s32 %s122, 1
      %p126 = scmp.eq.s32.totalorder %s25, 1
      %p127 = scmp.ne.s32.totalorder %s122, %s124
      %p128 = scmp.eq.s32.totalorder %s25, 0
      %p129 = por %p127, %p128
      %p130 = scmp.ne.s32.totalorder %s122, %s124
      %p131 = scmp.eq.s32.totalorder %s30, 1
      %p132 = por %p130, %p131
      %p133 = scmp.ne.s32.totalorder %s124, %s125
      %p134 = scmp.eq.s32.totalorder %s30, 0
      %p135 = por %p133, %p134
      %p136 = scmp.ne.s32.totalorder %s124, %s125
      %p137 = scmp.eq.s32.totalorder %s31, 1
      %p138 = por %p136, %p137
      %p140 = scmp.ne.s32.totalorder %s125, %s139
      %p141 = scmp.eq.s32.totalorder %s31, 0
      %p142 = por %p140, %p141
      %s144 = sadd.s32 %s143, 1
      %p147 = scmp.eq.s32.totalorder %s25, 1
      %p148 = scmp.ne.s32.totalorder %s143, %s145
      %p149 = scmp.eq.s32.totalorder %s25, 0
      %p150 = por %p148, %p149
      %p151 = scmp.ne.s32.totalorder %s143, %s145
      %p152 = scmp.eq.s32.totalorder %s30, 1
      %p153 = por %p151, %p152
      %p154 = scmp.ne.s32.totalorder %s145, %s146
      %p155 = scmp.eq.s32.totalorder %s30, 0
      %p156 = por %p154, %p155
      %p157 = scmp.ne.s32.totalorder %s145, %s146
      %p158 = scmp.eq.s32.totalorder %s31, 1
      %p159 = por %p157, %p158
      %p161 = scmp.ne.s32.totalorder %s146, %s160
      %p162 = scmp.eq.s32.totalorder %s31, 0
      %p163 = por %p161, %p162
      %s165 = sadd.s32 %s164, 1
      %p168 = scmp.eq.s32.totalorder %s25, 1
      %p169 = scmp.ne.s32.totalorder %s164, %s166
      %p170 = scmp.eq.s32.totalorder %s25, 0
      %p171 = por %p169, %p170
      %p172 = scmp.ne.s32.totalorder %s164, %s166
      %p173 = scmp.eq.s32.totalorder %s30, 1
      %p174 = por %p172, %p173
      %p175 = scmp.ne.s32.totalorder %s166, %s167
      %p176 = scmp.eq.s32.totalorder %s30, 0
      %p177 = por %p175, %p176
      %p178 = scmp.ne.s32.totalorder %s166, %s167
      %p179 = scmp.eq.s32.totalorder %s31, 1
      %p180 = por %p178, %p179
      %p182 = scmp.ne.s32.totalorder %s167, %s181
      %p183 = scmp.eq.s32.totalorder %s31, 0
      %p184 = por %p182, %p183
      %s186 = sadd.s32 %s185, 1
      %p189 = scmp.eq.s32.totalorder %s25, 1
      %p190 = scmp.ne.s32.totalorder %s185, %s187
      %p191 = scmp.eq.s32.totalorder %s25, 0
      %p192 = por %p190, %p191
      %p193 = scmp.ne.s32.totalorder %s185, %s187
      %p194 = scmp.eq.s32.totalorder %s30, 1
      %p195 = por %p193, %p194
      %p196 = scmp.ne.s32.totalorder %s187, %s188
      %p197 = scmp.eq.s32.totalorder %s30, 0
      %p198 = por %p196, %p197
      %p199 = scmp.ne.s32.totalorder %s187, %s188
      %p200 = scmp.eq.s32.totalorder %s31, 1
      %p201 = por %p199, %p200
      %p203 = scmp.ne.s32.totalorder %s188, %s202
      %p204 = scmp.eq.s32.totalorder %s31, 0
      %p205 = por %p203, %p204
      %s207 = sadd.s32 %s206, 1
      %p210 = scmp.eq.s32.totalorder %s25, 1
      %p211 = scmp.ne.s32.totalorder %s206, %s208
      %p212 = scmp.eq.s32.totalorder %s25, 0
      %p213 = por %p211, %p212
      %p214 = scmp.ne.s32.totalorder %s206, %s208
      %p215 = scmp.eq.s32.totalorder %s30, 1
      %p216 = por %p214, %p215
      %p217 = scmp.ne.s32.totalorder %s208, %s209
      %p218 = scmp.eq.s32.totalorder %s30, 0
      %p219 = por %p217, %p218
      %p220 = scmp.ne.s32.totalorder %s208, %s209
      %p221 = scmp.eq.s32.totalorder %s31, 1
      %p222 = por %p220, %p221
      %p224 = scmp.ne.s32.totalorder %s209, %s223
      %p225 = scmp.eq.s32.totalorder %s31, 0
      %p226 = por %p224, %p225
      %s228 = sadd.s32 %s227, 1
      %p231 = scmp.eq.s32.totalorder %s25, 1
      %p232 = scmp.ne.s32.totalorder %s227, %s229
      %p233 = scmp.eq.s32.totalorder %s25, 0
      %p234 = por %p232, %p233
      %p235 = scmp.ne.s32.totalorder %s227, %s229
      %p236 = scmp.eq.s32.totalorder %s30, 1
      %p237 = por %p235, %p236
      %p238 = scmp.ne.s32.totalorder %s229, %s230
      %p239 = scmp.eq.s32.totalorder %s30, 0
      %p240 = por %p238, %p239
      %p241 = scmp.ne.s32.totalorder %s229, %s230
      %p242 = scmp.eq.s32.totalorder %s31, 1
      %p243 = por %p241, %p242
      %p245 = scmp.ne.s32.totalorder %s230, %s244
      %p246 = scmp.eq.s32.totalorder %s31, 0
      %p247 = por %p245, %p246
      %s249 = sadd.s32 %s248, 1
      %p252 = scmp.eq.s32.totalorder %s25, 1
      %p253 = scmp.ne.s32.totalorder %s248, %s250
      %p254 = scmp.eq.s32.totalorder %s25, 0
      %p255 = por %p253, %p254
      %p256 = scmp.ne.s32.totalorder %s248, %s250
      %p257 = scmp.eq.s32.totalorder %s30, 1
      %p258 = por %p256, %p257
      %p259 = scmp.ne.s32.totalorder %s250, %s251
      %p260 = scmp.eq.s32.totalorder %s30, 0
      %p261 = por %p259, %p260
      %p262 = scmp.ne.s32.totalorder %s250, %s251
      %p263 = scmp.eq.s32.totalorder %s31, 1
      %p264 = por %p262, %p263
      %p266 = scmp.ne.s32.totalorder %s251, %s265
      %p267 = scmp.eq.s32.totalorder %s31, 0
      %p268 = por %p266, %p267
      %s269 = ssub.s32 %s25, %s32
      %p270 = scmp.eq.s32.totalorder %s269, 0
      %s272 = sadd.s32 %s271, 1
      %s273 = scalar_select %p270, %s271, %s272
      %p276 = pneg %p270
      %p277 = scmp.eq.s32.totalorder %s25, 1
      %p278 = por %p276, %p277
      %p279 = scmp.ne.s32.totalorder %s271, %s274
      %p280 = scmp.eq.s32.totalorder %s25, 0
      %p281 = por %p279, %p280
      %p282 = scmp.ne.s32.totalorder %s271, %s274
      %p283 = scmp.eq.s32.totalorder %s30, 1
      %p284 = por %p282, %p283
      %p285 = scmp.ne.s32.totalorder %s274, %s275
      %p286 = scmp.eq.s32.totalorder %s30, 0
      %p287 = por %p285, %p286
      %p288 = scmp.ne.s32.totalorder %s274, %s275
      %p289 = scmp.eq.s32.totalorder %s31, 1
      %p290 = por %p288, %p289
      %p292 = scmp.ne.s32.totalorder %s275, %s291
      %p293 = scmp.eq.s32.totalorder %s31, 0
      %p294 = por %p292, %p293
      %p295 = scmp.le.s32.totalorder 1, %s25
      %p296 = scmp.lt.s32.totalorder %s25, 3
      %p297 = pnand %p295, %p296
      %p298 = pneg %p297
      // Predicated region
      $region9: #{tpu_custom_call.1} parent=5 // pred_check
        _
      $region10: #{tpu_custom_call.1} parent=5 // pred_check_branch
        %300 = sbr.rel (%p297) target = $region12
      $region11: #{tpu_custom_call.1} parent=5 // pred_region
        %s301 = ssub.s32 %s25, 1
        // Predicated region
        $region13: #{tpu_custom_call.1} parent=11 // pred_check
          %p302 = pneg %p72
        $region14: #{tpu_custom_call.1} parent=11 // pred_check_branch
          %304 = sbr.rel (%p302) target = $region16
        $region15: #{tpu_custom_call.1} parent=11 // pred_region
          %306 = vsyncadd [#allocation9], 0
          %s308 = sshll.u32 %s1, 4
          %s309 = int_to_ptr.hbm [resolvable:$true] %s308
          %s310 = sshll.u32 [#allocation8], 4
          %s311 = int_to_ptr.vmem [resolvable:$true] %s310
          %313 = dma.hbm_to_vmem [thread:$0]  %s309, 16, %s311, [#allocation9]
        $region16: #{tpu_custom_call.1} parent=11 // pred_fallthru
          _
        // Predicated region
        $region17: #{tpu_custom_call.1} parent=11 // pred_check
          %p314 = pneg %p93
        $region18: #{tpu_custom_call.1} parent=11 // pred_check_branch
          %316 = sbr.rel (%p314) target = $region20
        $region19: #{tpu_custom_call.1} parent=11 // pred_region
          _
        $region20: #{tpu_custom_call.1} parent=11 // pred_fallthru
          _
        // Predicated region
        $region21: #{tpu_custom_call.1} parent=11 // pred_check
          %p317 = pneg %p114
        $region22: #{tpu_custom_call.1} parent=11 // pred_check_branch
          %319 = sbr.rel (%p317) target = $region24
        $region23: #{tpu_custom_call.1} parent=11 // pred_region
          _
        $region24: #{tpu_custom_call.1} parent=11 // pred_fallthru
          _
        // Predicated region
        $region25: #{tpu_custom_call.1} parent=11 // pred_check
          %p320 = pneg %p135
        $region26: #{tpu_custom_call.1} parent=11 // pred_check_branch
          %322 = sbr.rel (%p320) target = $region28
        $region27: #{tpu_custom_call.1} parent=11 // pred_region
          _
        $region28: #{tpu_custom_call.1} parent=11 // pred_fallthru
          _
        // Predicated region
        $region29: #{tpu_custom_call.1} parent=11 // pred_check
          %p323 = pneg %p156
        $region30: #{tpu_custom_call.1} parent=11 // pred_check_branch
          %325 = sbr.rel (%p323) target = $region32
        $region31: #{tpu_custom_call.1} parent=11 // pred_region
          _
        $region32: #{tpu_custom_call.1} parent=11 // pred_fallthru
          _
        // Predicated region
        $region33: #{tpu_custom_call.1} parent=11 // pred_check
          %p326 = pneg %p177
        $region34: #{tpu_custom_call.1} parent=11 // pred_check_branch
          %328 = sbr.rel (%p326) target = $region36
        $region35: #{tpu_custom_call.1} parent=11 // pred_region
          _
        $region36: #{tpu_custom_call.1} parent=11 // pred_fallthru
          _
        // Predicated region
        $region37: #{tpu_custom_call.1} parent=11 // pred_check
          %p329 = pneg %p198
        $region38: #{tpu_custom_call.1} parent=11 // pred_check_branch
          %331 = sbr.rel (%p329) target = $region40
        $region39: #{tpu_custom_call.1} parent=11 // pred_region
          %333 = vsyncadd [#allocation9], 0
          %s334 = sshll.u32 %s7, 4
          %s335 = int_to_ptr.hbm [resolvable:$true] %s334
          %s336 = sshll.u32 [#allocation10], 4
          %s337 = int_to_ptr.vmem [resolvable:$true] %s336
          %342 = dma.hbm_to_vmem [thread:$0]  %s335, 1536, %s337, [#allocation9], 64, 64, 4
        $region40: #{tpu_custom_call.1} parent=11 // pred_fallthru
          _
        // Predicated region
        $region41: #{tpu_custom_call.1} parent=11 // pred_check
          %p343 = pneg %p219
        $region42: #{tpu_custom_call.1} parent=11 // pred_check_branch
          %345 = sbr.rel (%p343) target = $region44
        $region43: #{tpu_custom_call.1} parent=11 // pred_region
          %347 = vsyncadd [#allocation12], 0
          %s348 = sshll.u32 %s8, 4
          %s349 = int_to_ptr.hbm [resolvable:$true] %s348
          %s350 = sshll.u32 [#allocation11], 4
          %s351 = int_to_ptr.vmem [resolvable:$true] %s350
          %356 = dma.hbm_to_vmem [thread:$0]  %s349, 3072, %s351, [#allocation12], 64, 64, 4
        $region44: #{tpu_custom_call.1} parent=11 // pred_fallthru
          _
        // Predicated region
        $region45: #{tpu_custom_call.1} parent=11 // pred_check
          %p357 = pneg %p240
        $region46: #{tpu_custom_call.1} parent=11 // pred_check_branch
          %359 = sbr.rel (%p357) target = $region48
        $region47: #{tpu_custom_call.1} parent=11 // pred_region
          %361 = vsyncadd [#allocation12], 0
          %s362 = sshll.u32 %s9, 4
          %s363 = int_to_ptr.hbm [resolvable:$true] %s362
          %s364 = sshll.u32 [#allocation13], 4
          %s365 = int_to_ptr.vmem [resolvable:$true] %s364
          %370 = dma.hbm_to_vmem [thread:$0]  %s363, 1536, %s365, [#allocation12], 64, 64, 4
        $region48: #{tpu_custom_call.1} parent=11 // pred_fallthru
          _
        // Predicated region
        $region49: #{tpu_custom_call.1} parent=11 // pred_check
          %p371 = pneg %p261
        $region50: #{tpu_custom_call.1} parent=11 // pred_check_branch
          %373 = sbr.rel (%p371) target = $region52
        $region51: #{tpu_custom_call.1} parent=11 // pred_region
          _
        $region52: #{tpu_custom_call.1} parent=11 // pred_fallthru
          _
      $region12: #{tpu_custom_call.1} parent=5 // pred_fallthru
        _
      %p374 = scmp.lt.s32.totalorder %s25, 2
      // Predicated region
      $region53: #{tpu_custom_call.1} parent=5 // pred_check
        %p375 = pneg %p374
      $region54: #{tpu_custom_call.1} parent=5 // pred_check_branch
        %377 = sbr.rel (%p375) target = $region56
      $region55: #{tpu_custom_call.1} parent=5 // pred_region
        // Predicated region
        $region57: #{tpu_custom_call.1} parent=55 // pred_check
          %p378 = pneg %p45
        $region58: #{tpu_custom_call.1} parent=55 // pred_check_branch
          %380 = sbr.rel (%p378) target = $region60
        $region59: #{tpu_custom_call.1} parent=55 // pred_region
          %s381 = sand.u32 %s35, 1
          %s382 = scalar_lea.sflag [#allocation6], %s381
          %s383 = sand.u32 %s35, 1
          %s384 = smul.addr %s383, 128
          %s385 = scalar_lea.vmem [#allocation5], %s384
          %s386 = smul.u32 8, %s25
          %388 = vsyncadd %s382, 0
          %s389 = smul.addr %s386, 2
          %s390 = smul.addr %s389, 8
          %s391 = scalar_lea.hbm %s0, %s390
          %s392 = sshll.u32 %s391, 4
          %s393 = int_to_ptr.hbm [resolvable:$true] %s392
          %s394 = sshll.u32 %s385, 4
          %s395 = int_to_ptr.vmem [resolvable:$true] %s394
          %400 = dma.hbm_to_vmem [thread:$0]  %s393, 2048, %s395, %s382, 128, 128, 8
        $region60: #{tpu_custom_call.1} parent=55 // pred_fallthru
          _
      $region56: #{tpu_custom_call.1} parent=5 // pred_fallthru
        _
      %p401 = scmp.le.s32.totalorder 1, %s25
      %p402 = scmp.lt.s32.totalorder %s25, 3
      %p403 = pnand %p401, %p402
      %p404 = pneg %p403
      // Predicated region
      $region61: #{tpu_custom_call.1} parent=5 // pred_check
        _
      $region62: #{tpu_custom_call.1} parent=5 // pred_check_branch
        %406 = sbr.rel (%p403) target = $region64
      $region63: #{tpu_custom_call.1} parent=5 // pred_region
        %s407 = ssub.s32 %s25, 1
        %s408 = sand.u32 %s38, 1
        %s409 = scalar_lea.sflag [#allocation6], %s408
        %s410 = sand.u32 %s38, 1
        %s411 = smul.addr %s410, 128
        %s412 = scalar_lea.vmem [#allocation5], %s411
        // Predicated region
        $region65: #{tpu_custom_call.1} parent=63 // pred_check
          %p413 = pneg %p51
        $region66: #{tpu_custom_call.1} parent=63 // pred_check_branch
          %415 = sbr.rel (%p413) target = $region68
        $region67: #{tpu_custom_call.1} parent=63 // pred_region
          %417 = dma.done %s409, 2048
        $region68: #{tpu_custom_call.1} parent=63 // pred_fallthru
          _
        // Predicated region
        $region69: #{tpu_custom_call.1} parent=63 // pred_check
          %p418 = pneg %p72
        $region70: #{tpu_custom_call.1} parent=63 // pred_check_branch
          %420 = sbr.rel (%p418) target = $region72
        $region71: #{tpu_custom_call.1} parent=63 // pred_region
          %422 = dma.done [#allocation9], 16
        $region72: #{tpu_custom_call.1} parent=63 // pred_fallthru
          _
        // Predicated region
        $region73: #{tpu_custom_call.1} parent=63 // pred_check
          %p423 = pneg %p198
        $region74: #{tpu_custom_call.1} parent=63 // pred_check_branch
          %425 = sbr.rel (%p423) target = $region76
        $region75: #{tpu_custom_call.1} parent=63 // pred_region
          %427 = dma.done [#allocation9], 1536
        $region76: #{tpu_custom_call.1} parent=63 // pred_fallthru
          _
        // Predicated region
        $region77: #{tpu_custom_call.1} parent=63 // pred_check
          %p428 = pneg %p219
        $region78: #{tpu_custom_call.1} parent=63 // pred_check_branch
          %430 = sbr.rel (%p428) target = $region80
        $region79: #{tpu_custom_call.1} parent=63 // pred_region
          %432 = dma.done [#allocation12], 3072
        $region80: #{tpu_custom_call.1} parent=63 // pred_fallthru
          _
        // Predicated region
        $region81: #{tpu_custom_call.1} parent=63 // pred_check
          %p433 = pneg %p240
        $region82: #{tpu_custom_call.1} parent=63 // pred_check_branch
          %435 = sbr.rel (%p433) target = $region84
        $region83: #{tpu_custom_call.1} parent=63 // pred_region
          %437 = dma.done [#allocation12], 1536
        $region84: #{tpu_custom_call.1} parent=63 // pred_fallthru
          _
        %s438 = sand.u32 %s38, 1
        %s439 = scalar_lea.sflag [#allocation6], %s438
        %s440 = sand.u32 %s38, 1
        %s441 = smul.addr %s440, 128
        %s442 = scalar_lea.vmem [#allocation5], %s441
        %p443 = pneg %p51
        %p444 = pneg %p48
        %p445 = pneg %p72
        %p446 = pneg %p69
        %p447 = pneg %p93
        %p448 = pneg %p90
        %p449 = pneg %p114
        %p450 = pneg %p111
        %p451 = pneg %p135
        %p452 = pneg %p132
        %p453 = pneg %p156
        %p454 = pneg %p153
        %p455 = pneg %p177
        %p456 = pneg %p174
        %p457 = pneg %p198
        %p458 = pneg %p195
        %p459 = pneg %p219
        %p460 = pneg %p216
        %p461 = pneg %p240
        %p462 = pneg %p237
        %p463 = pneg %p261
        %p464 = pneg %p258
        %p465 = pneg %p287
        %p466 = pneg %p284
        %s467 = sand.u32 %s274, 1
        %s468 = scalar_lea.sflag [#allocation7], %s467
        %s469 = sand.u32 %s274, 1
        %s470 = smul.addr %s469, 128
        %s471 = scalar_lea.vmem [#allocation14], %s470
        %s472 = smul.u32 8, %s30
        %s473 = smul.u32 8, %s30
        %vm475 = vcmask 523264
        %476 = vst.msk [vmem:[#allocation2] sm:$0xff] %vm475, 0.0
        %477 = vst.msk [vmem:[#allocation2 + $0x8] sm:$0xff] %vm475, 0.0
        %478 = vst.msk [vmem:[#allocation2 + $0x10] sm:$0xff] %vm475, 0.0
        %479 = vst.msk [vmem:[#allocation2 + $0x18] sm:$0xff] %vm475, 0.0
        %480 = vst.msk [vmem:[#allocation2 + $0x20] sm:$0xff] %vm475, 0.0
        %481 = vst.msk [vmem:[#allocation2 + $0x28] sm:$0xff] %vm475, 0.0
        %482 = vst.msk [vmem:[#allocation2 + $0x30] sm:$0xff] %vm475, 0.0
        %483 = vst.msk [vmem:[#allocation2 + $0x38] sm:$0xff] %vm475, 0.0
        %484 = vst.msk [vmem:[#allocation2 + $0x40] sm:$0xff] %vm475, 0.0
        %485 = vst.msk [vmem:[#allocation2 + $0x48] sm:$0xff] %vm475, 0.0
        %486 = vst.msk [vmem:[#allocation2 + $0x50] sm:$0xff] %vm475, 0.0
        %487 = vst.msk [vmem:[#allocation2 + $0x58] sm:$0xff] %vm475, 0.0
        %488 = vst.msk [vmem:[#allocation2 + $0x60] sm:$0xff] %vm475, 0.0
        %489 = vst.msk [vmem:[#allocation2 + $0x68] sm:$0xff] %vm475, 0.0
        %490 = vst.msk [vmem:[#allocation2 + $0x70] sm:$0xff] %vm475, 0.0
        %491 = vst.msk [vmem:[#allocation2 + $0x78] sm:$0xff] %vm475, 0.0
        %492 = vst.msk [vmem:[#allocation2 + $0x80] sm:$0xff] %vm475, 0.0
        %493 = vst.msk [vmem:[#allocation2 + $0x88] sm:$0xff] %vm475, 0.0
        %494 = vst.msk [vmem:[#allocation2 + $0x90] sm:$0xff] %vm475, 0.0
        %495 = vst.msk [vmem:[#allocation2 + $0x98] sm:$0xff] %vm475, 0.0
        %496 = vst.msk [vmem:[#allocation2 + $0xa0] sm:$0xff] %vm475, 0.0
        %497 = vst.msk [vmem:[#allocation2 + $0xa8] sm:$0xff] %vm475, 0.0
        %498 = vst.msk [vmem:[#allocation2 + $0xb0] sm:$0xff] %vm475, 0.0
        %499 = vst.msk [vmem:[#allocation2 + $0xb8] sm:$0xff] %vm475, 0.0
        %500 = vst.msk [vmem:[#allocation2 + $0xc0] sm:$0xff] %vm475, 0.0
        %501 = vst.msk [vmem:[#allocation3] sm:$0xff] %vm475, 0.0
        %502 = vst.msk [vmem:[#allocation3 + $0x8] sm:$0xff] %vm475, 0.0
        %503 = vst.msk [vmem:[#allocation3 + $0x10] sm:$0xff] %vm475, 0.0
        %504 = vst.msk [vmem:[#allocation3 + $0x18] sm:$0xff] %vm475, 0.0
        %505 = vst.msk [vmem:[#allocation3 + $0x20] sm:$0xff] %vm475, 0.0
        %506 = vst.msk [vmem:[#allocation3 + $0x28] sm:$0xff] %vm475, 0.0
        %507 = vst.msk [vmem:[#allocation3 + $0x30] sm:$0xff] %vm475, 0.0
        %508 = vst.msk [vmem:[#allocation3 + $0x38] sm:$0xff] %vm475, 0.0
        %509 = vst.msk [vmem:[#allocation3 + $0x40] sm:$0xff] %vm475, 0.0
        %510 = vst.msk [vmem:[#allocation3 + $0x48] sm:$0xff] %vm475, 0.0
        %511 = vst.msk [vmem:[#allocation3 + $0x50] sm:$0xff] %vm475, 0.0
        %512 = vst.msk [vmem:[#allocation3 + $0x58] sm:$0xff] %vm475, 0.0
        %513 = vst.msk [vmem:[#allocation3 + $0x60] sm:$0xff] %vm475, 0.0
        %514 = vst.msk [vmem:[#allocation3 + $0x68] sm:$0xff] %vm475, 0.0
        %515 = vst.msk [vmem:[#allocation3 + $0x70] sm:$0xff] %vm475, 0.0
        %516 = vst.msk [vmem:[#allocation3 + $0x78] sm:$0xff] %vm475, 0.0
        %517 = vst.msk [vmem:[#allocation3 + $0x80] sm:$0xff] %vm475, 0.0
        %518 = vst.msk [vmem:[#allocation3 + $0x88] sm:$0xff] %vm475, 0.0
        %519 = vst.msk [vmem:[#allocation3 + $0x90] sm:$0xff] %vm475, 0.0
        %520 = vst.msk [vmem:[#allocation3 + $0x98] sm:$0xff] %vm475, 0.0
        %521 = vst.msk [vmem:[#allocation3 + $0xa0] sm:$0xff] %vm475, 0.0
        %522 = vst.msk [vmem:[#allocation3 + $0xa8] sm:$0xff] %vm475, 0.0
        %523 = vst.msk [vmem:[#allocation3 + $0xb0] sm:$0xff] %vm475, 0.0
        %524 = vst.msk [vmem:[#allocation3 + $0xb8] sm:$0xff] %vm475, 0.0
        %525 = vst.msk [vmem:[#allocation3 + $0xc0] sm:$0xff] %vm475, 0.0
        %526 = vst [vmem:[#allocation4] sm:$0xff] 0.0
        %527 = vst [vmem:[#allocation4 + $0x8] sm:$0xff] 0.0
        %528 = vst [vmem:[#allocation4 + $0x10] sm:$0xff] 0.0
        %529 = vst [vmem:[#allocation4 + $0x18] sm:$0xff] 0.0
        %530 = vst [vmem:[#allocation4 + $0x20] sm:$0xff] 0.0
        %531 = vst [vmem:[#allocation4 + $0x28] sm:$0xff] 0.0
        %532 = vst [vmem:[#allocation4 + $0x30] sm:$0xff] 0.0
        %533 = vst [vmem:[#allocation4 + $0x38] sm:$0xff] 0.0
        %534 = vst [vmem:[#allocation4 + $0x40] sm:$0xff] 0.0
        %535 = vst [vmem:[#allocation4 + $0x48] sm:$0xff] 0.0
        %536 = vst [vmem:[#allocation4 + $0x50] sm:$0xff] 0.0
        %537 = vst [vmem:[#allocation4 + $0x58] sm:$0xff] 0.0
        %538 = vst [vmem:[#allocation4 + $0x60] sm:$0xff] 0.0
        %539 = vst [vmem:[#allocation4 + $0x68] sm:$0xff] 0.0
        %540 = vst [vmem:[#allocation4 + $0x70] sm:$0xff] 0.0
        %541 = vst [vmem:[#allocation4 + $0x78] sm:$0xff] 0.0
        %542 = vst [vmem:[#allocation4 + $0x80] sm:$0xff] 0.0
        %543 = vst [vmem:[#allocation4 + $0x88] sm:$0xff] 0.0
        %544 = vst [vmem:[#allocation4 + $0x90] sm:$0xff] 0.0
        %545 = vst [vmem:[#allocation4 + $0x98] sm:$0xff] 0.0
        %546 = vst [vmem:[#allocation4 + $0xa0] sm:$0xff] 0.0
        %547 = vst [vmem:[#allocation4 + $0xa8] sm:$0xff] 0.0
        %548 = vst [vmem:[#allocation4 + $0xb0] sm:$0xff] 0.0
        %549 = vst [vmem:[#allocation4 + $0xb8] sm:$0xff] 0.0
        %550 = vst [vmem:[#allocation4 + $0xc0] sm:$0xff] 0.0
        %v551 = vld [vmem:[%s412] sm:$0xff]
        %v552 = vld [vmem:[%s412 + $0x8] sm:$0xff]
        %v553 = vld [vmem:[%s412 + $0x10] sm:$0xff]
        %v554 = vld [vmem:[%s412 + $0x18] sm:$0xff]
        %v555 = vld [vmem:[%s412 + $0x20] sm:$0xff]
        %v556 = vld [vmem:[%s412 + $0x28] sm:$0xff]
        %v557 = vld [vmem:[%s412 + $0x30] sm:$0xff]
        %v558 = vld [vmem:[%s412 + $0x38] sm:$0xff]
        %v559 = vld [vmem:[%s412 + $0x40] sm:$0xff]
        %v560 = vld [vmem:[%s412 + $0x48] sm:$0xff]
        %v561 = vld [vmem:[%s412 + $0x50] sm:$0xff]
        %v562 = vld [vmem:[%s412 + $0x58] sm:$0xff]
        %v563 = vld [vmem:[%s412 + $0x60] sm:$0xff]
        %v564 = vld [vmem:[%s412 + $0x68] sm:$0xff]
        %v565 = vld [vmem:[%s412 + $0x70] sm:$0xff]
        %v566 = vld [vmem:[%s412 + $0x78] sm:$0xff]
        %v567 = vld [vmem:[#allocation8] sm:$0x1]
        %v569 = vperm.slane %v567, 0
        %v571 = vmul.f32 %v551, %v569
        %v572 = vmul.f32 %v552, %v569
        %v573 = vmul.f32 %v553, %v569
        %v574 = vmul.f32 %v554, %v569
        %v575 = vmul.f32 %v555, %v569
        %v576 = vmul.f32 %v556, %v569
        %v577 = vmul.f32 %v557, %v569
        %v578 = vmul.f32 %v558, %v569
        %v579 = vmul.f32 %v559, %v569
        %v580 = vmul.f32 %v560, %v569
        %v581 = vmul.f32 %v561, %v569
        %v582 = vmul.f32 %v562, %v569
        %v583 = vmul.f32 %v563, %v569
        %v584 = vmul.f32 %v564, %v569
        %v585 = vmul.f32 %v565, %v569
        %v586 = vmul.f32 %v566, %v569
        %v587 = vld [vmem:[%s2] sm:$0x1]
        %v589 = vperm.slane %v587, 0
        %v591 = vadd.f32 %v571, %v589
        %v592 = vadd.f32 %v572, %v589
        %v593 = vadd.f32 %v573, %v589
        %v594 = vadd.f32 %v574, %v589
        %v595 = vadd.f32 %v575, %v589
        %v596 = vadd.f32 %v576, %v589
        %v597 = vadd.f32 %v577, %v589
        %v598 = vadd.f32 %v578, %v589
        %v599 = vadd.f32 %v579, %v589
        %v600 = vadd.f32 %v580, %v589
        %v601 = vadd.f32 %v581, %v589
        %v602 = vadd.f32 %v582, %v589
        %v603 = vadd.f32 %v583, %v589
        %v604 = vadd.f32 %v584, %v589
        %v605 = vadd.f32 %v585, %v589
        %v606 = vadd.f32 %v586, %v589
        %v607 = vmax.f32 %v591, 0.0
        %v608 = vmax.f32 %v592, 0.0
        %v609 = vmax.f32 %v593, 0.0
        %v610 = vmax.f32 %v594, 0.0
        %v611 = vmax.f32 %v595, 0.0
        %v612 = vmax.f32 %v596, 0.0
        %v613 = vmax.f32 %v597, 0.0
        %v614 = vmax.f32 %v598, 0.0
        %v615 = vmax.f32 %v599, 0.0
        %v616 = vmax.f32 %v600, 0.0
        %v617 = vmax.f32 %v601, 0.0
        %v618 = vmax.f32 %v602, 0.0
        %v619 = vmax.f32 %v603, 0.0
        %v620 = vmax.f32 %v604, 0.0
        %v621 = vmax.f32 %v605, 0.0
        %v622 = vmax.f32 %v606, 0.0
        %v623 = vld [vmem:[%s5] sm:$0x1]
        %v625 = vperm.slane %v623, 0
        %v627 = vmul.f32 %v551, %v625
        %v628 = vmul.f32 %v552, %v625
        %v629 = vmul.f32 %v553, %v625
        %v630 = vmul.f32 %v554, %v625
        %v631 = vmul.f32 %v555, %v625
        %v632 = vmul.f32 %v556, %v625
        %v633 = vmul.f32 %v557, %v625
        %v634 = vmul.f32 %v558, %v625
        %v635 = vmul.f32 %v559, %v625
        %v636 = vmul.f32 %v560, %v625
        %v637 = vmul.f32 %v561, %v625
        %v638 = vmul.f32 %v562, %v625
        %v639 = vmul.f32 %v563, %v625
        %v640 = vmul.f32 %v564, %v625
        %v641 = vmul.f32 %v565, %v625
        %v642 = vmul.f32 %v566, %v625
        %v643 = vld [vmem:[%s6] sm:$0x1]
        %v645 = vperm.slane %v643, 0
        %v647 = vadd.f32 %v627, %v645
        %v648 = vadd.f32 %v628, %v645
        %v649 = vadd.f32 %v629, %v645
        %v650 = vadd.f32 %v630, %v645
        %v651 = vadd.f32 %v631, %v645
        %v652 = vadd.f32 %v632, %v645
        %v653 = vadd.f32 %v633, %v645
        %v654 = vadd.f32 %v634, %v645
        %v655 = vadd.f32 %v635, %v645
        %v656 = vadd.f32 %v636, %v645
        %v657 = vadd.f32 %v637, %v645
        %v658 = vadd.f32 %v638, %v645
        %v659 = vadd.f32 %v639, %v645
        %v660 = vadd.f32 %v640, %v645
        %v661 = vadd.f32 %v641, %v645
        %v662 = vadd.f32 %v642, %v645
        %v663 = vmax.f32 %v647, 0.0
        %v664 = vmax.f32 %v648, 0.0
        %v665 = vmax.f32 %v649, 0.0
        %v666 = vmax.f32 %v650, 0.0
        %v667 = vmax.f32 %v651, 0.0
        %v668 = vmax.f32 %v652, 0.0
        %v669 = vmax.f32 %v653, 0.0
        %v670 = vmax.f32 %v654, 0.0
        %v671 = vmax.f32 %v655, 0.0
        %v672 = vmax.f32 %v656, 0.0
        %v673 = vmax.f32 %v657, 0.0
        %v674 = vmax.f32 %v658, 0.0
        %v675 = vmax.f32 %v659, 0.0
        %v676 = vmax.f32 %v660, 0.0
        %v677 = vmax.f32 %v661, 0.0
        %v678 = vmax.f32 %v662, 0.0
        %679 = vst.msk [vmem:[#allocation2 + $0x1] sm:$0xff] %vm475, %v607
        %680 = vst.msk [vmem:[#allocation2 + $0x9] sm:$0xff] %vm475, %v608
        %681 = vst.msk [vmem:[#allocation3 + $0x1] sm:$0xff] %vm475, %v663
        %682 = vst.msk [vmem:[#allocation3 + $0x9] sm:$0xff] %vm475, %v664
        %683 = vst.msk [vmem:[#allocation2 + $0x19] sm:$0xff] %vm475, %v609
        %684 = vst.msk [vmem:[#allocation2 + $0x21] sm:$0xff] %vm475, %v610
        %685 = vst.msk [vmem:[#allocation3 + $0x19] sm:$0xff] %vm475, %v665
        %686 = vst.msk [vmem:[#allocation3 + $0x21] sm:$0xff] %vm475, %v666
        %687 = vst.msk [vmem:[#allocation2 + $0x31] sm:$0xff] %vm475, %v611
        %688 = vst.msk [vmem:[#allocation2 + $0x39] sm:$0xff] %vm475, %v612
        %689 = vst.msk [vmem:[#allocation3 + $0x31] sm:$0xff] %vm475, %v667
        %690 = vst.msk [vmem:[#allocation3 + $0x39] sm:$0xff] %vm475, %v668
        %691 = vst.msk [vmem:[#allocation2 + $0x49] sm:$0xff] %vm475, %v613
        %692 = vst.msk [vmem:[#allocation2 + $0x51] sm:$0xff] %vm475, %v614
        %693 = vst.msk [vmem:[#allocation3 + $0x49] sm:$0xff] %vm475, %v669
        %694 = vst.msk [vmem:[#allocation3 + $0x51] sm:$0xff] %vm475, %v670
        %695 = vst.msk [vmem:[#allocation2 + $0x61] sm:$0xff] %vm475, %v615
        %696 = vst.msk [vmem:[#allocation2 + $0x69] sm:$0xff] %vm475, %v616
        %697 = vst.msk [vmem:[#allocation3 + $0x61] sm:$0xff] %vm475, %v671
        %698 = vst.msk [vmem:[#allocation3 + $0x69] sm:$0xff] %vm475, %v672
        %699 = vst.msk [vmem:[#allocation2 + $0x79] sm:$0xff] %vm475, %v617
        %700 = vst.msk [vmem:[#allocation2 + $0x81] sm:$0xff] %vm475, %v618
        %701 = vst.msk [vmem:[#allocation3 + $0x79] sm:$0xff] %vm475, %v673
        %702 = vst.msk [vmem:[#allocation3 + $0x81] sm:$0xff] %vm475, %v674
        %703 = vst.msk [vmem:[#allocation2 + $0x91] sm:$0xff] %vm475, %v619
        %704 = vst.msk [vmem:[#allocation2 + $0x99] sm:$0xff] %vm475, %v620
        %705 = vst.msk [vmem:[#allocation3 + $0x91] sm:$0xff] %vm475, %v675
        %706 = vst.msk [vmem:[#allocation3 + $0x99] sm:$0xff] %vm475, %v676
        %707 = vst.msk [vmem:[#allocation2 + $0xa9] sm:$0xff] %vm475, %v621
        %708 = vst.msk [vmem:[#allocation2 + $0xb1] sm:$0xff] %vm475, %v622
        %709 = vst.msk [vmem:[#allocation3 + $0xa9] sm:$0xff] %vm475, %v677
        %710 = vst.msk [vmem:[#allocation3 + $0xb1] sm:$0xff] %vm475, %v678
        %v711 = vld [vmem:[#allocation3] sm:$0xff]
        %v712 = vld [vmem:[#allocation3 + $0x8] sm:$0xff]
        %v713 = vld [vmem:[#allocation3 + $0x10] sm:$0xff]
        %v714 = vld [vmem:[#allocation3 + $0x18] sm:$0xff]
        %v715 = vld [vmem:[#allocation3 + $0x20] sm:$0xff]
        %v716 = vld [vmem:[#allocation3 + $0x28] sm:$0xff]
        %v717 = vld [vmem:[#allocation3 + $0x30] sm:$0xff]
        %v718 = vld [vmem:[#allocation3 + $0x38] sm:$0xff]
        %v719 = vld [vmem:[#allocation3 + $0x40] sm:$0xff]
        %v720 = vld [vmem:[#allocation3 + $0x48] sm:$0xff]
        %v721 = vld [vmem:[#allocation3 + $0x50] sm:$0xff]
        %v722 = vld [vmem:[#allocation3 + $0x58] sm:$0xff]
        %v723 = vld [vmem:[#allocation3 + $0x60] sm:$0xff]
        %v724 = vld [vmem:[#allocation3 + $0x68] sm:$0xff]
        %v725 = vld [vmem:[#allocation3 + $0x70] sm:$0xff]
        %v726 = vld [vmem:[#allocation3 + $0x78] sm:$0xff]
        %v727 = vld [vmem:[#allocation3 + $0x80] sm:$0xff]
        %v728 = vld [vmem:[#allocation3 + $0x88] sm:$0xff]
        %v729 = vld [vmem:[#allocation3 + $0x90] sm:$0xff]
        %v730 = vld [vmem:[#allocation3 + $0x98] sm:$0xff]
        %v731 = vld [vmem:[#allocation3 + $0xa0] sm:$0xff]
        %v732 = vld [vmem:[#allocation3 + $0xa8] sm:$0xff]
        %v733 = vld [vmem:[#allocation3 + $0xb0] sm:$0xff]
        %v734 = vld [vmem:[#allocation3 + $0xb8] sm:$0xff]
        %v735 = vpack.c.bf16 %v712, %v711
        %v736 = vpack.c.bf16 %v714, %v713
        %v737 = vpack.c.bf16 %v716, %v715
        %v738 = vpack.c.bf16 %v718, %v717
        %v739 = vpack.c.bf16 %v720, %v719
        %v740 = vpack.c.bf16 %v722, %v721
        %v741 = vpack.c.bf16 %v724, %v723
        %v742 = vpack.c.bf16 %v726, %v725
        %v743 = vpack.c.bf16 %v728, %v727
        %v744 = vpack.c.bf16 %v730, %v729
        %v745 = vpack.c.bf16 %v732, %v731
        %v746 = vpack.c.bf16 %v734, %v733
        %v747 = vld [vmem:[#allocation13] sm:$0xf]
        %v748 = vld [vmem:[#allocation13 + $0x4] sm:$0xf]
        %v749 = vld [vmem:[#allocation13 + $0x8] sm:$0xf]
        %v750 = vld [vmem:[#allocation13 + $0xc] sm:$0xf]
        %v751 = vld [vmem:[#allocation13 + $0x10] sm:$0xf]
        %v752 = vld [vmem:[#allocation13 + $0x14] sm:$0xf]
        %v753 = vld [vmem:[#allocation13 + $0x18] sm:$0xf]
        %v754 = vld [vmem:[#allocation13 + $0x1c] sm:$0xf]
        %v755 = vld [vmem:[#allocation3 + $0x1] sm:$0xff]
        %v756 = vld [vmem:[#allocation3 + $0x9] sm:$0xff]
        %v757 = vld [vmem:[#allocation3 + $0x11] sm:$0xff]
        %v758 = vld [vmem:[#allocation3 + $0x19] sm:$0xff]
        %v759 = vld [vmem:[#allocation3 + $0x21] sm:$0xff]
        %v760 = vld [vmem:[#allocation3 + $0x29] sm:$0xff]
        %v761 = vld [vmem:[#allocation3 + $0x31] sm:$0xff]
        %v762 = vld [vmem:[#allocation3 + $0x39] sm:$0xff]
        %v763 = vld [vmem:[#allocation3 + $0x41] sm:$0xff]
        %v764 = vld [vmem:[#allocation3 + $0x49] sm:$0xff]
        %v765 = vld [vmem:[#allocation3 + $0x51] sm:$0xff]
        %v766 = vld [vmem:[#allocation3 + $0x59] sm:$0xff]
        %v767 = vld [vmem:[#allocation3 + $0x61] sm:$0xff]
        %v768 = vld [vmem:[#allocation3 + $0x69] sm:$0xff]
        %v769 = vld [vmem:[#allocation3 + $0x71] sm:$0xff]
        %v770 = vld [vmem:[#allocation3 + $0x79] sm:$0xff]
        %v771 = vld [vmem:[#allocation3 + $0x81] sm:$0xff]
        %v772 = vld [vmem:[#allocation3 + $0x89] sm:$0xff]
        %v773 = vld [vmem:[#allocation3 + $0x91] sm:$0xff]
        %v774 = vld [vmem:[#allocation3 + $0x99] sm:$0xff]
        %v775 = vld [vmem:[#allocation3 + $0xa1] sm:$0xff]
        %v776 = vld [vmem:[#allocation3 + $0xa9] sm:$0xff]
        %v777 = vld [vmem:[#allocation3 + $0xb1] sm:$0xff]
        %v778 = vld [vmem:[#allocation3 + $0xb9] sm:$0xff]
        %v779 = vpack.c.bf16 %v756, %v755
        %v780 = vpack.c.bf16 %v758, %v757
        %v781 = vpack.c.bf16 %v760, %v759
        %v782 = vpack.c.bf16 %v762, %v761
        %v783 = vpack.c.bf16 %v764, %v763
        %v784 = vpack.c.bf16 %v766, %v765
        %v785 = vpack.c.bf16 %v768, %v767
        %v786 = vpack.c.bf16 %v770, %v769
        %v787 = vpack.c.bf16 %v772, %v771
        %v788 = vpack.c.bf16 %v774, %v773
        %v789 = vpack.c.bf16 %v776, %v775
        %v790 = vpack.c.bf16 %v778, %v777
        %s791 = scalar_lea.vmem [#allocation13], 32
        %v792 = vld [vmem:[%s791] sm:$0xf]
        %v793 = vld [vmem:[%s791 + $0x4] sm:$0xf]
        %v794 = vld [vmem:[%s791 + $0x8] sm:$0xf]
        %v795 = vld [vmem:[%s791 + $0xc] sm:$0xf]
        %v796 = vld [vmem:[%s791 + $0x10] sm:$0xf]
        %v797 = vld [vmem:[%s791 + $0x14] sm:$0xf]
        %v798 = vld [vmem:[%s791 + $0x18] sm:$0xf]
        %v799 = vld [vmem:[%s791 + $0x1c] sm:$0xf]
        %v808 = vunpack.c.l.b16 %v792
        %v809 = vunpack.c.l.b16 %v793
        %v810 = vunpack.c.l.b16 %v794
        %v811 = vunpack.c.l.b16 %v795
        %v812 = vunpack.c.l.b16 %v796
        %v813 = vunpack.c.l.b16 %v797
        %v814 = vunpack.c.l.b16 %v798
        %v815 = vunpack.c.l.b16 %v799
        %v816 = vpack.c.b16 %v809, %v808
        %v817 = vpack.c.b16 %v811, %v810
        %v818 = vpack.c.b16 %v813, %v812
        %v819 = vpack.c.b16 %v815, %v814
        %v825 = vsel %vm475, %v779, 0
        %v828 = vsel %vm475, %v780, 0
        %v831 = vsel %vm475, %v781, 0
        %v834 = vsel %vm475, %v782, 0
        %v837 = vsel %vm475, %v783, 0
        %v840 = vsel %vm475, %v784, 0
        %v843 = vsel %vm475, %v785, 0
        %v846 = vsel %vm475, %v786, 0
        %v849 = vsel %vm475, %v787, 0
        %v852 = vsel %vm475, %v788, 0
        %v855 = vsel %vm475, %v789, 0
        %v858 = vsel %vm475, %v790, 0
        %860 = vmatpush.bf16.msra.mxu0 0
        %861 = vmatpush.bf16.msra.mxu0 0
        %862 = vmatpush.bf16.msra.mxu0 0
        %863 = vmatpush.bf16.msra.mxu0 0
        %864 = vmatpush.bf16.msra.mxu0 %v819
        %865 = vmatpush.bf16.msra.mxu0 %v818
        %866 = vmatpush.bf16.msra.mxu0 %v817
        %867 = vmatpush.bf16.msra.mxu0 %v816
        %868 = vmatmul.bf16.gmra.mxu0 %v825
        %v869 = vpop.f32.mrf.mxu0
        %v870 = vadd.f32 0.0, %v869
        %v871 = vpop.f32.mrf.mxu0
        %v872 = vadd.f32 0.0, %v871
        %873 = vmatmul.bf16.gmra.mxu0 %v828
        %v874 = vpop.f32.mrf.mxu0
        %v875 = vpop.f32.mrf.mxu0
        %v876 = vadd.f32 0.0, %v875
        %877 = vmatmul.bf16.gmra.mxu0 %v831
        %v878 = vpop.f32.mrf.mxu0
        %v879 = vadd.f32 0.0, %v878
        %v880 = vpop.f32.mrf.mxu0
        %881 = vmatmul.bf16.gmra.mxu0 %v834
        %v882 = vpop.f32.mrf.mxu0
        %v883 = vadd.f32 0.0, %v882
        %v884 = vpop.f32.mrf.mxu0
        %v885 = vadd.f32 0.0, %v884
        %886 = vmatmul.bf16.gmra.mxu0 %v837
        %v887 = vpop.f32.mrf.mxu0
        %v888 = vpop.f32.mrf.mxu0
        %v889 = vadd.f32 0.0, %v888
        %890 = vmatmul.bf16.gmra.mxu0 %v840
        %v891 = vpop.f32.mrf.mxu0
        %v892 = vadd.f32 0.0, %v891
        %v893 = vpop.f32.mrf.mxu0
        %894 = vmatmul.bf16.gmra.mxu0 %v843
        %v895 = vpop.f32.mrf.mxu0
        %v896 = vadd.f32 0.0, %v895
        %v897 = vpop.f32.mrf.mxu0
        %v898 = vadd.f32 0.0, %v897
        %899 = vmatmul.bf16.gmra.mxu0 %v846
        %v900 = vpop.f32.mrf.mxu0
        %v901 = vpop.f32.mrf.mxu0
        %v902 = vadd.f32 0.0, %v901
        %903 = vmatmul.bf16.gmra.mxu0 %v849
        %v904 = vpop.f32.mrf.mxu0
        %v905 = vadd.f32 0.0, %v904
        %v906 = vpop.f32.mrf.mxu0
        %907 = vmatmul.bf16.gmra.mxu0 %v852
        %v908 = vpop.f32.mrf.mxu0
        %v909 = vadd.f32 0.0, %v908
        %v910 = vpop.f32.mrf.mxu0
        %v911 = vadd.f32 0.0, %v910
        %912 = vmatmul.bf16.gmra.mxu0 %v855
        %v913 = vpop.f32.mrf.mxu0
        %v914 = vpop.f32.mrf.mxu0
        %v915 = vadd.f32 0.0, %v914
        %916 = vmatmul.bf16.gmra.mxu0 %v858
        %v917 = vpop.f32.mrf.mxu0
        %v918 = vadd.f32 0.0, %v917
        %v919 = vpop.f32.mrf.mxu0
        %920 = vdwg.mxu0
        %v929 = vunpack.c.l.b16 %v747
        %v930 = vunpack.c.l.b16 %v748
        %v931 = vunpack.c.l.b16 %v749
        %v932 = vunpack.c.l.b16 %v750
        %v933 = vunpack.c.l.b16 %v751
        %v934 = vunpack.c.l.b16 %v752
        %v935 = vunpack.c.l.b16 %v753
        %v936 = vunpack.c.l.b16 %v754
        %v937 = vpack.c.b16 %v930, %v929
        %v938 = vpack.c.b16 %v932, %v931
        %v939 = vpack.c.b16 %v934, %v933
        %v940 = vpack.c.b16 %v936, %v935
        %v946 = vsel %vm475, %v735, 0
        %v949 = vsel %vm475, %v736, 0
        %v952 = vsel %vm475, %v737, 0
        %v955 = vsel %vm475, %v738, 0
        %v958 = vsel %vm475, %v739, 0
        %v961 = vsel %vm475, %v740, 0
        %v964 = vsel %vm475, %v741, 0
        %v967 = vsel %vm475, %v742, 0
        %v970 = vsel %vm475, %v743, 0
        %v973 = vsel %vm475, %v744, 0
        %v976 = vsel %vm475, %v745, 0
        %v979 = vsel %vm475, %v746, 0
        %981 = vmatpush.bf16.msra.mxu0 0
        %982 = vmatpush.bf16.msra.mxu0 0
        %983 = vmatpush.bf16.msra.mxu0 0
        %984 = vmatpush.bf16.msra.mxu0 0
        %985 = vmatpush.bf16.msra.mxu0 %v940
        %986 = vmatpush.bf16.msra.mxu0 %v939
        %987 = vmatpush.bf16.msra.mxu0 %v938
        %988 = vmatpush.bf16.msra.mxu0 %v937
        %989 = vmatmul.bf16.gmra.mxu0 %v946
        %v990 = vpop.f32.mrf.mxu0
        %v991 = vadd.f32 %v870, %v990
        %v992 = vpop.f32.mrf.mxu0
        %v993 = vadd.f32 %v872, %v992
        %994 = vmatmul.bf16.gmra.mxu0 %v949
        %v995 = vpop.f32.mrf.mxu0
        %v996 = vpop.f32.mrf.mxu0
        %v997 = vadd.f32 %v876, %v996
        %998 = vmatmul.bf16.gmra.mxu0 %v952
        %v999 = vpop.f32.mrf.mxu0
        %v1000 = vadd.f32 %v879, %v999
        %v1001 = vpop.f32.mrf.mxu0
        %1002 = vmatmul.bf16.gmra.mxu0 %v955
        %v1003 = vpop.f32.mrf.mxu0
        %v1004 = vadd.f32 %v883, %v1003
        %v1005 = vpop.f32.mrf.mxu0
        %v1006 = vadd.f32 %v885, %v1005
        %1007 = vmatmul.bf16.gmra.mxu0 %v958
        %v1008 = vpop.f32.mrf.mxu0
        %v1009 = vpop.f32.mrf.mxu0
        %v1010 = vadd.f32 %v889, %v1009
        %1011 = vmatmul.bf16.gmra.mxu0 %v961
        %v1012 = vpop.f32.mrf.mxu0
        %v1013 = vadd.f32 %v892, %v1012
        %v1014 = vpop.f32.mrf.mxu0
        %1015 = vmatmul.bf16.gmra.mxu0 %v964
        %v1016 = vpop.f32.mrf.mxu0
        %v1017 = vadd.f32 %v896, %v1016
        %v1018 = vpop.f32.mrf.mxu0
        %v1019 = vadd.f32 %v898, %v1018
        %1020 = vmatmul.bf16.gmra.mxu0 %v967
        %v1021 = vpop.f32.mrf.mxu0
        %v1022 = vpop.f32.mrf.mxu0
        %v1023 = vadd.f32 %v902, %v1022
        %1024 = vmatmul.bf16.gmra.mxu0 %v970
        %v1025 = vpop.f32.mrf.mxu0
        %v1026 = vadd.f32 %v905, %v1025
        %v1027 = vpop.f32.mrf.mxu0
        %1028 = vmatmul.bf16.gmra.mxu0 %v973
        %v1029 = vpop.f32.mrf.mxu0
        %v1030 = vadd.f32 %v909, %v1029
        %v1031 = vpop.f32.mrf.mxu0
        %v1032 = vadd.f32 %v911, %v1031
        %1033 = vmatmul.bf16.gmra.mxu0 %v976
        %v1034 = vpop.f32.mrf.mxu0
        %v1035 = vpop.f32.mrf.mxu0
        %v1036 = vadd.f32 %v915, %v1035
        %1037 = vmatmul.bf16.gmra.mxu0 %v979
        %v1038 = vpop.f32.mrf.mxu0
        %v1039 = vadd.f32 %v918, %v1038
        %v1040 = vpop.f32.mrf.mxu0
        %1041 = vdwg.mxu0
        %v1042 = vld [vmem:[#allocation3 + $0x2] sm:$0xff]
        %v1043 = vld [vmem:[#allocation3 + $0xa] sm:$0xff]
        %v1044 = vld [vmem:[#allocation3 + $0x12] sm:$0xff]
        %v1045 = vld [vmem:[#allocation3 + $0x1a] sm:$0xff]
        %v1046 = vld [vmem:[#allocation3 + $0x22] sm:$0xff]
        %v1047 = vld [vmem:[#allocation3 + $0x2a] sm:$0xff]
        %v1048 = vld [vmem:[#allocation3 + $0x32] sm:$0xff]
        %v1049 = vld [vmem:[#allocation3 + $0x3a] sm:$0xff]
        %v1050 = vld [vmem:[#allocation3 + $0x42] sm:$0xff]
        %v1051 = vld [vmem:[#allocation3 + $0x4a] sm:$0xff]
        %v1052 = vld [vmem:[#allocation3 + $0x52] sm:$0xff]
        %v1053 = vld [vmem:[#allocation3 + $0x5a] sm:$0xff]
        %v1054 = vld [vmem:[#allocation3 + $0x62] sm:$0xff]
        %v1055 = vld [vmem:[#allocation3 + $0x6a] sm:$0xff]
        %v1056 = vld [vmem:[#allocation3 + $0x72] sm:$0xff]
        %v1057 = vld [vmem:[#allocation3 + $0x7a] sm:$0xff]
        %v1058 = vld [vmem:[#allocation3 + $0x82] sm:$0xff]
        %v1059 = vld [vmem:[#allocation3 + $0x8a] sm:$0xff]
        %v1060 = vld [vmem:[#allocation3 + $0x92] sm:$0xff]
        %v1061 = vld [vmem:[#allocation3 + $0x9a] sm:$0xff]
        %v1062 = vld [vmem:[#allocation3 + $0xa2] sm:$0xff]
        %v1063 = vld [vmem:[#allocation3 + $0xaa] sm:$0xff]
        %v1064 = vld [vmem:[#allocation3 + $0xb2] sm:$0xff]
        %v1065 = vld [vmem:[#allocation3 + $0xba] sm:$0xff]
        %v1066 = vpack.c.bf16 %v1043, %v1042
        %v1067 = vpack.c.bf16 %v1045, %v1044
        %v1068 = vpack.c.bf16 %v1047, %v1046
        %v1069 = vpack.c.bf16 %v1049, %v1048
        %v1070 = vpack.c.bf16 %v1051, %v1050
        %v1071 = vpack.c.bf16 %v1053, %v1052
        %v1072 = vpack.c.bf16 %v1055, %v1054
        %v1073 = vpack.c.bf16 %v1057, %v1056
        %v1074 = vpack.c.bf16 %v1059, %v1058
        %v1075 = vpack.c.bf16 %v1061, %v1060
        %v1076 = vpack.c.bf16 %v1063, %v1062
        %v1077 = vpack.c.bf16 %v1065, %v1064
        %s1078 = scalar_lea.vmem [#allocation13], 64
        %v1079 = vld [vmem:[%s1078] sm:$0xf]
        %v1080 = vld [vmem:[%s1078 + $0x4] sm:$0xf]
        %v1081 = vld [vmem:[%s1078 + $0x8] sm:$0xf]
        %v1082 = vld [vmem:[%s1078 + $0xc] sm:$0xf]
        %v1083 = vld [vmem:[%s1078 + $0x10] sm:$0xf]
        %v1084 = vld [vmem:[%s1078 + $0x14] sm:$0xf]
        %v1085 = vld [vmem:[%s1078 + $0x18] sm:$0xf]
        %v1086 = vld [vmem:[%s1078 + $0x1c] sm:$0xf]
        %v1095 = vunpack.c.l.b16 %v1079
        %v1096 = vunpack.c.l.b16 %v1080
        %v1097 = vunpack.c.l.b16 %v1081
        %v1098 = vunpack.c.l.b16 %v1082
        %v1099 = vunpack.c.l.b16 %v1083
        %v1100 = vunpack.c.l.b16 %v1084
        %v1101 = vunpack.c.l.b16 %v1085
        %v1102 = vunpack.c.l.b16 %v1086
        %v1103 = vpack.c.b16 %v1096, %v1095
        %v1104 = vpack.c.b16 %v1098, %v1097
        %v1105 = vpack.c.b16 %v1100, %v1099
        %v1106 = vpack.c.b16 %v1102, %v1101
        %v1112 = vsel %vm475, %v1066, 0
        %v1115 = vsel %vm475, %v1067, 0
        %v1118 = vsel %vm475, %v1068, 0
        %v1121 = vsel %vm475, %v1069, 0
        %v1124 = vsel %vm475, %v1070, 0
        %v1127 = vsel %vm475, %v1071, 0
        %v1130 = vsel %vm475, %v1072, 0
        %v1133 = vsel %vm475, %v1073, 0
        %v1136 = vsel %vm475, %v1074, 0
        %v1139 = vsel %vm475, %v1075, 0
        %v1142 = vsel %vm475, %v1076, 0
        %v1145 = vsel %vm475, %v1077, 0
        %1147 = vmatpush.bf16.msra.mxu0 0
        %1148 = vmatpush.bf16.msra.mxu0 0
        %1149 = vmatpush.bf16.msra.mxu0 0
        %1150 = vmatpush.bf16.msra.mxu0 0
        %1151 = vmatpush.bf16.msra.mxu0 %v1106
        %1152 = vmatpush.bf16.msra.mxu0 %v1105
        %1153 = vmatpush.bf16.msra.mxu0 %v1104
        %1154 = vmatpush.bf16.msra.mxu0 %v1103
        %1155 = vmatmul.bf16.gmra.mxu0 %v1112
        %v1156 = vpop.f32.mrf.mxu0
        %v1157 = vadd.f32 0.0, %v1156
        %v1158 = vpop.f32.mrf.mxu0
        %v1159 = vadd.f32 0.0, %v1158
        %1160 = vmatmul.bf16.gmra.mxu0 %v1115
        %v1161 = vpop.f32.mrf.mxu0
        %v1162 = vpop.f32.mrf.mxu0
        %v1163 = vadd.f32 0.0, %v1162
        %1164 = vmatmul.bf16.gmra.mxu0 %v1118
        %v1165 = vpop.f32.mrf.mxu0
        %v1166 = vadd.f32 0.0, %v1165
        %v1167 = vpop.f32.mrf.mxu0
        %1168 = vmatmul.bf16.gmra.mxu0 %v1121
        %v1169 = vpop.f32.mrf.mxu0
        %v1170 = vadd.f32 0.0, %v1169
        %v1171 = vpop.f32.mrf.mxu0
        %v1172 = vadd.f32 0.0, %v1171
        %1173 = vmatmul.bf16.gmra.mxu0 %v1124
        %v1174 = vpop.f32.mrf.mxu0
        %v1175 = vpop.f32.mrf.mxu0
        %v1176 = vadd.f32 0.0, %v1175
        %1177 = vmatmul.bf16.gmra.mxu0 %v1127
        %v1178 = vpop.f32.mrf.mxu0
        %v1179 = vadd.f32 0.0, %v1178
        %v1180 = vpop.f32.mrf.mxu0
        %1181 = vmatmul.bf16.gmra.mxu0 %v1130
        %v1182 = vpop.f32.mrf.mxu0
        %v1183 = vadd.f32 0.0, %v1182
        %v1184 = vpop.f32.mrf.mxu0
        %v1185 = vadd.f32 0.0, %v1184
        %1186 = vmatmul.bf16.gmra.mxu0 %v1133
        %v1187 = vpop.f32.mrf.mxu0
        %v1188 = vpop.f32.mrf.mxu0
        %v1189 = vadd.f32 0.0, %v1188
        %1190 = vmatmul.bf16.gmra.mxu0 %v1136
        %v1191 = vpop.f32.mrf.mxu0
        %v1192 = vadd.f32 0.0, %v1191
        %v1193 = vpop.f32.mrf.mxu0
        %1194 = vmatmul.bf16.gmra.mxu0 %v1139
        %v1195 = vpop.f32.mrf.mxu0
        %v1196 = vadd.f32 0.0, %v1195
        %v1197 = vpop.f32.mrf.mxu0
        %v1198 = vadd.f32 0.0, %v1197
        %1199 = vmatmul.bf16.gmra.mxu0 %v1142
        %v1200 = vpop.f32.mrf.mxu0
        %v1201 = vpop.f32.mrf.mxu0
        %v1202 = vadd.f32 0.0, %v1201
        %1203 = vmatmul.bf16.gmra.mxu0 %v1145
        %v1204 = vpop.f32.mrf.mxu0
        %v1205 = vadd.f32 0.0, %v1204
        %v1206 = vpop.f32.mrf.mxu0
        %1207 = vdwg.mxu0
        %v1208 = vadd.f32 %v991, %v1157
        %v1209 = vadd.f32 %v993, %v1159
        %v1210 = vadd.f32 %v997, %v1163
        %v1211 = vadd.f32 %v1000, %v1166
        %v1212 = vadd.f32 %v1004, %v1170
        %v1213 = vadd.f32 %v1006, %v1172
        %v1214 = vadd.f32 %v1010, %v1176
        %v1215 = vadd.f32 %v1013, %v1179
        %v1216 = vadd.f32 %v1017, %v1183
        %v1217 = vadd.f32 %v1019, %v1185
        %v1218 = vadd.f32 %v1023, %v1189
        %v1219 = vadd.f32 %v1026, %v1192
        %v1220 = vadd.f32 %v1030, %v1196
        %v1221 = vadd.f32 %v1032, %v1198
        %v1222 = vadd.f32 %v1036, %v1202
        %v1223 = vadd.f32 %v1039, %v1205
        %v1224 = vld [vmem:[%s10] sm:$0x1]
        %v1226 = vperm.slane %v1224, 0
        %v1228 = vadd.f32 %v1208, %v1226
        %v1229 = vadd.f32 %v1209, %v1226
        %v1230 = vadd.f32 %v1210, %v1226
        %v1231 = vadd.f32 %v1211, %v1226
        %v1232 = vadd.f32 %v1212, %v1226
        %v1233 = vadd.f32 %v1213, %v1226
        %v1234 = vadd.f32 %v1214, %v1226
        %v1235 = vadd.f32 %v1215, %v1226
        %v1236 = vadd.f32 %v1216, %v1226
        %v1237 = vadd.f32 %v1217, %v1226
        %v1238 = vadd.f32 %v1218, %v1226
        %v1239 = vadd.f32 %v1219, %v1226
        %v1240 = vadd.f32 %v1220, %v1226
        %v1241 = vadd.f32 %v1221, %v1226
        %v1242 = vadd.f32 %v1222, %v1226
        %v1243 = vadd.f32 %v1223, %v1226
        %1244 = vst [vmem:[%s471] sm:$0xff] %v1228
        %1245 = vst [vmem:[%s471 + $0x8] sm:$0xff] %v1229
        %1246 = vst [vmem:[%s471 + $0x10] sm:$0xff] %v1230
        %1247 = vst [vmem:[%s471 + $0x18] sm:$0xff] %v1231
        %1248 = vst [vmem:[%s471 + $0x20] sm:$0xff] %v1232
        %1249 = vst [vmem:[%s471 + $0x28] sm:$0xff] %v1233
        %1250 = vst [vmem:[%s471 + $0x30] sm:$0xff] %v1234
        %1251 = vst [vmem:[%s471 + $0x38] sm:$0xff] %v1235
        %1252 = vst [vmem:[%s471 + $0x40] sm:$0xff] %v1236
        %1253 = vst [vmem:[%s471 + $0x48] sm:$0xff] %v1237
        %1254 = vst [vmem:[%s471 + $0x50] sm:$0xff] %v1238
        %1255 = vst [vmem:[%s471 + $0x58] sm:$0xff] %v1239
        %1256 = vst [vmem:[%s471 + $0x60] sm:$0xff] %v1240
        %1257 = vst [vmem:[%s471 + $0x68] sm:$0xff] %v1241
        %1258 = vst [vmem:[%s471 + $0x70] sm:$0xff] %v1242
        %1259 = vst [vmem:[%s471 + $0x78] sm:$0xff] %v1243
        %v1260 = vld [vmem:[#allocation2] sm:$0xff]
        %v1261 = vld [vmem:[#allocation2 + $0x8] sm:$0xff]
        %v1262 = vld [vmem:[#allocation2 + $0x10] sm:$0xff]
        %v1263 = vld [vmem:[#allocation2 + $0x18] sm:$0xff]
        %v1264 = vld [vmem:[#allocation2 + $0x20] sm:$0xff]
        %v1265 = vld [vmem:[#allocation2 + $0x28] sm:$0xff]
        %v1266 = vld [vmem:[#allocation2 + $0x30] sm:$0xff]
        %v1267 = vld [vmem:[#allocation2 + $0x38] sm:$0xff]
        %v1268 = vld [vmem:[#allocation2 + $0x40] sm:$0xff]
        %v1269 = vld [vmem:[#allocation2 + $0x48] sm:$0xff]
        %v1270 = vld [vmem:[#allocation2 + $0x50] sm:$0xff]
        %v1271 = vld [vmem:[#allocation2 + $0x58] sm:$0xff]
        %v1272 = vld [vmem:[#allocation2 + $0x60] sm:$0xff]
        %v1273 = vld [vmem:[#allocation2 + $0x68] sm:$0xff]
        %v1274 = vld [vmem:[#allocation2 + $0x70] sm:$0xff]
        %v1275 = vld [vmem:[#allocation2 + $0x78] sm:$0xff]
        %v1276 = vld [vmem:[#allocation2 + $0x80] sm:$0xff]
        %v1277 = vld [vmem:[#allocation2 + $0x88] sm:$0xff]
        %v1278 = vld [vmem:[#allocation2 + $0x90] sm:$0xff]
        %v1279 = vld [vmem:[#allocation2 + $0x98] sm:$0xff]
        %v1280 = vld [vmem:[#allocation2 + $0xa0] sm:$0xff]
        %v1281 = vld [vmem:[#allocation2 + $0xa8] sm:$0xff]
        %v1282 = vld [vmem:[#allocation2 + $0xb0] sm:$0xff]
        %v1283 = vld [vmem:[#allocation2 + $0xb8] sm:$0xff]
        %v1284 = vpack.c.bf16 %v1261, %v1260
        %v1285 = vpack.c.bf16 %v1263, %v1262
        %v1286 = vpack.c.bf16 %v1265, %v1264
        %v1287 = vpack.c.bf16 %v1267, %v1266
        %v1288 = vpack.c.bf16 %v1269, %v1268
        %v1289 = vpack.c.bf16 %v1271, %v1270
        %v1290 = vpack.c.bf16 %v1273, %v1272
        %v1291 = vpack.c.bf16 %v1275, %v1274
        %v1292 = vpack.c.bf16 %v1277, %v1276
        %v1293 = vpack.c.bf16 %v1279, %v1278
        %v1294 = vpack.c.bf16 %v1281, %v1280
        %v1295 = vpack.c.bf16 %v1283, %v1282
        %v1296 = vld [vmem:[#allocation10] sm:$0xf]
        %v1297 = vld [vmem:[#allocation10 + $0x4] sm:$0xf]
        %v1298 = vld [vmem:[#allocation10 + $0x8] sm:$0xf]
        %v1299 = vld [vmem:[#allocation10 + $0xc] sm:$0xf]
        %v1300 = vld [vmem:[#allocation10 + $0x10] sm:$0xf]
        %v1301 = vld [vmem:[#allocation10 + $0x14] sm:$0xf]
        %v1302 = vld [vmem:[#allocation10 + $0x18] sm:$0xf]
        %v1303 = vld [vmem:[#allocation10 + $0x1c] sm:$0xf]
        %v1304 = vld [vmem:[#allocation2 + $0x1] sm:$0xff]
        %v1305 = vld [vmem:[#allocation2 + $0x9] sm:$0xff]
        %v1306 = vld [vmem:[#allocation2 + $0x11] sm:$0xff]
        %v1307 = vld [vmem:[#allocation2 + $0x19] sm:$0xff]
        %v1308 = vld [vmem:[#allocation2 + $0x21] sm:$0xff]
        %v1309 = vld [vmem:[#allocation2 + $0x29] sm:$0xff]
        %v1310 = vld [vmem:[#allocation2 + $0x31] sm:$0xff]
        %v1311 = vld [vmem:[#allocation2 + $0x39] sm:$0xff]
        %v1312 = vld [vmem:[#allocation2 + $0x41] sm:$0xff]
        %v1313 = vld [vmem:[#allocation2 + $0x49] sm:$0xff]
        %v1314 = vld [vmem:[#allocation2 + $0x51] sm:$0xff]
        %v1315 = vld [vmem:[#allocation2 + $0x59] sm:$0xff]
        %v1316 = vld [vmem:[#allocation2 + $0x61] sm:$0xff]
        %v1317 = vld [vmem:[#allocation2 + $0x69] sm:$0xff]
        %v1318 = vld [vmem:[#allocation2 + $0x71] sm:$0xff]
        %v1319 = vld [vmem:[#allocation2 + $0x79] sm:$0xff]
        %v1320 = vld [vmem:[#allocation2 + $0x81] sm:$0xff]
        %v1321 = vld [vmem:[#allocation2 + $0x89] sm:$0xff]
        %v1322 = vld [vmem:[#allocation2 + $0x91] sm:$0xff]
        %v1323 = vld [vmem:[#allocation2 + $0x99] sm:$0xff]
        %v1324 = vld [vmem:[#allocation2 + $0xa1] sm:$0xff]
        %v1325 = vld [vmem:[#allocation2 + $0xa9] sm:$0xff]
        %v1326 = vld [vmem:[#allocation2 + $0xb1] sm:$0xff]
        %v1327 = vld [vmem:[#allocation2 + $0xb9] sm:$0xff]
        %v1328 = vpack.c.bf16 %v1305, %v1304
        %v1329 = vpack.c.bf16 %v1307, %v1306
        %v1330 = vpack.c.bf16 %v1309, %v1308
        %v1331 = vpack.c.bf16 %v1311, %v1310
        %v1332 = vpack.c.bf16 %v1313, %v1312
        %v1333 = vpack.c.bf16 %v1315, %v1314
        %v1334 = vpack.c.bf16 %v1317, %v1316
        %v1335 = vpack.c.bf16 %v1319, %v1318
        %v1336 = vpack.c.bf16 %v1321, %v1320
        %v1337 = vpack.c.bf16 %v1323, %v1322
        %v1338 = vpack.c.bf16 %v1325, %v1324
        %v1339 = vpack.c.bf16 %v1327, %v1326
        %s1340 = scalar_lea.vmem [#allocation10], 32
        %v1341 = vld [vmem:[%s1340] sm:$0xf]
        %v1342 = vld [vmem:[%s1340 + $0x4] sm:$0xf]
        %v1343 = vld [vmem:[%s1340 + $0x8] sm:$0xf]
        %v1344 = vld [vmem:[%s1340 + $0xc] sm:$0xf]
        %v1345 = vld [vmem:[%s1340 + $0x10] sm:$0xf]
        %v1346 = vld [vmem:[%s1340 + $0x14] sm:$0xf]
        %v1347 = vld [vmem:[%s1340 + $0x18] sm:$0xf]
        %v1348 = vld [vmem:[%s1340 + $0x1c] sm:$0xf]
        %v1357 = vunpack.c.l.b16 %v1341
        %v1358 = vunpack.c.l.b16 %v1342
        %v1359 = vunpack.c.l.b16 %v1343
        %v1360 = vunpack.c.l.b16 %v1344
        %v1361 = vunpack.c.l.b16 %v1345
        %v1362 = vunpack.c.l.b16 %v1346
        %v1363 = vunpack.c.l.b16 %v1347
        %v1364 = vunpack.c.l.b16 %v1348
        %v1365 = vpack.c.b16 %v1358, %v1357
        %v1366 = vpack.c.b16 %v1360, %v1359
        %v1367 = vpack.c.b16 %v1362, %v1361
        %v1368 = vpack.c.b16 %v1364, %v1363
        %v1374 = vsel %vm475, %v1328, 0
        %v1377 = vsel %vm475, %v1329, 0
        %v1380 = vsel %vm475, %v1330, 0
        %v1383 = vsel %vm475, %v1331, 0
        %v1386 = vsel %vm475, %v1332, 0
        %v1389 = vsel %vm475, %v1333, 0
        %v1392 = vsel %vm475, %v1334, 0
        %v1395 = vsel %vm475, %v1335, 0
        %v1398 = vsel %vm475, %v1336, 0
        %v1401 = vsel %vm475, %v1337, 0
        %v1404 = vsel %vm475, %v1338, 0
        %v1407 = vsel %vm475, %v1339, 0
        %1409 = vmatpush.bf16.msra.mxu0 0
        %1410 = vmatpush.bf16.msra.mxu0 0
        %1411 = vmatpush.bf16.msra.mxu0 0
        %1412 = vmatpush.bf16.msra.mxu0 0
        %1413 = vmatpush.bf16.msra.mxu0 %v1368
        %1414 = vmatpush.bf16.msra.mxu0 %v1367
        %1415 = vmatpush.bf16.msra.mxu0 %v1366
        %1416 = vmatpush.bf16.msra.mxu0 %v1365
        %1417 = vmatmul.bf16.gmra.mxu0 %v1374
        %v1418 = vpop.f32.mrf.mxu0
        %v1419 = vadd.f32 0.0, %v1418
        %v1420 = vpop.f32.mrf.mxu0
        %v1421 = vadd.f32 0.0, %v1420
        %1422 = vmatmul.bf16.gmra.mxu0 %v1377
        %v1423 = vpop.f32.mrf.mxu0
        %v1424 = vpop.f32.mrf.mxu0
        %v1425 = vadd.f32 0.0, %v1424
        %1426 = vmatmul.bf16.gmra.mxu0 %v1380
        %v1427 = vpop.f32.mrf.mxu0
        %v1428 = vadd.f32 0.0, %v1427
        %v1429 = vpop.f32.mrf.mxu0
        %1430 = vmatmul.bf16.gmra.mxu0 %v1383
        %v1431 = vpop.f32.mrf.mxu0
        %v1432 = vadd.f32 0.0, %v1431
        %v1433 = vpop.f32.mrf.mxu0
        %v1434 = vadd.f32 0.0, %v1433
        %1435 = vmatmul.bf16.gmra.mxu0 %v1386
        %v1436 = vpop.f32.mrf.mxu0
        %v1437 = vpop.f32.mrf.mxu0
        %v1438 = vadd.f32 0.0, %v1437
        %1439 = vmatmul.bf16.gmra.mxu0 %v1389
        %v1440 = vpop.f32.mrf.mxu0
        %v1441 = vadd.f32 0.0, %v1440
        %v1442 = vpop.f32.mrf.mxu0
        %1443 = vmatmul.bf16.gmra.mxu0 %v1392
        %v1444 = vpop.f32.mrf.mxu0
        %v1445 = vadd.f32 0.0, %v1444
        %v1446 = vpop.f32.mrf.mxu0
        %v1447 = vadd.f32 0.0, %v1446
        %1448 = vmatmul.bf16.gmra.mxu0 %v1395
        %v1449 = vpop.f32.mrf.mxu0
        %v1450 = vpop.f32.mrf.mxu0
        %v1451 = vadd.f32 0.0, %v1450
        %1452 = vmatmul.bf16.gmra.mxu0 %v1398
        %v1453 = vpop.f32.mrf.mxu0
        %v1454 = vadd.f32 0.0, %v1453
        %v1455 = vpop.f32.mrf.mxu0
        %1456 = vmatmul.bf16.gmra.mxu0 %v1401
        %v1457 = vpop.f32.mrf.mxu0
        %v1458 = vadd.f32 0.0, %v1457
        %v1459 = vpop.f32.mrf.mxu0
        %v1460 = vadd.f32 0.0, %v1459
        %1461 = vmatmul.bf16.gmra.mxu0 %v1404
        %v1462 = vpop.f32.mrf.mxu0
        %v1463 = vpop.f32.mrf.mxu0
        %v1464 = vadd.f32 0.0, %v1463
        %1465 = vmatmul.bf16.gmra.mxu0 %v1407
        %v1466 = vpop.f32.mrf.mxu0
        %v1467 = vadd.f32 0.0, %v1466
        %v1468 = vpop.f32.mrf.mxu0
        %1469 = vdwg.mxu0
        %v1478 = vunpack.c.l.b16 %v1296
        %v1479 = vunpack.c.l.b16 %v1297
        %v1480 = vunpack.c.l.b16 %v1298
        %v1481 = vunpack.c.l.b16 %v1299
        %v1482 = vunpack.c.l.b16 %v1300
        %v1483 = vunpack.c.l.b16 %v1301
        %v1484 = vunpack.c.l.b16 %v1302
        %v1485 = vunpack.c.l.b16 %v1303
        %v1486 = vpack.c.b16 %v1479, %v1478
        %v1487 = vpack.c.b16 %v1481, %v1480
        %v1488 = vpack.c.b16 %v1483, %v1482
        %v1489 = vpack.c.b16 %v1485, %v1484
        %v1495 = vsel %vm475, %v1284, 0
        %v1498 = vsel %vm475, %v1285, 0
        %v1501 = vsel %vm475, %v1286, 0
        %v1504 = vsel %vm475, %v1287, 0
        %v1507 = vsel %vm475, %v1288, 0
        %v1510 = vsel %vm475, %v1289, 0
        %v1513 = vsel %vm475, %v1290, 0
        %v1516 = vsel %vm475, %v1291, 0
        %v1519 = vsel %vm475, %v1292, 0
        %v1522 = vsel %vm475, %v1293, 0
        %v1525 = vsel %vm475, %v1294, 0
        %v1528 = vsel %vm475, %v1295, 0
        %1530 = vmatpush.bf16.msra.mxu0 0
        %1531 = vmatpush.bf16.msra.mxu0 0
        %1532 = vmatpush.bf16.msra.mxu0 0
        %1533 = vmatpush.bf16.msra.mxu0 0
        %1534 = vmatpush.bf16.msra.mxu0 %v1489
        %1535 = vmatpush.bf16.msra.mxu0 %v1488
        %1536 = vmatpush.bf16.msra.mxu0 %v1487
        %1537 = vmatpush.bf16.msra.mxu0 %v1486
        %1538 = vmatmul.bf16.gmra.mxu0 %v1495
        %v1539 = vpop.f32.mrf.mxu0
        %v1540 = vadd.f32 %v1419, %v1539
        %v1541 = vpop.f32.mrf.mxu0
        %v1542 = vadd.f32 %v1421, %v1541
        %1543 = vmatmul.bf16.gmra.mxu0 %v1498
        %v1544 = vpop.f32.mrf.mxu0
        %v1545 = vpop.f32.mrf.mxu0
        %v1546 = vadd.f32 %v1425, %v1545
        %1547 = vmatmul.bf16.gmra.mxu0 %v1501
        %v1548 = vpop.f32.mrf.mxu0
        %v1549 = vadd.f32 %v1428, %v1548
        %v1550 = vpop.f32.mrf.mxu0
        %1551 = vmatmul.bf16.gmra.mxu0 %v1504
        %v1552 = vpop.f32.mrf.mxu0
        %v1553 = vadd.f32 %v1432, %v1552
        %v1554 = vpop.f32.mrf.mxu0
        %v1555 = vadd.f32 %v1434, %v1554
        %1556 = vmatmul.bf16.gmra.mxu0 %v1507
        %v1557 = vpop.f32.mrf.mxu0
        %v1558 = vpop.f32.mrf.mxu0
        %v1559 = vadd.f32 %v1438, %v1558
        %1560 = vmatmul.bf16.gmra.mxu0 %v1510
        %v1561 = vpop.f32.mrf.mxu0
        %v1562 = vadd.f32 %v1441, %v1561
        %v1563 = vpop.f32.mrf.mxu0
        %1564 = vmatmul.bf16.gmra.mxu0 %v1513
        %v1565 = vpop.f32.mrf.mxu0
        %v1566 = vadd.f32 %v1445, %v1565
        %v1567 = vpop.f32.mrf.mxu0
        %v1568 = vadd.f32 %v1447, %v1567
        %1569 = vmatmul.bf16.gmra.mxu0 %v1516
        %v1570 = vpop.f32.mrf.mxu0
        %v1571 = vpop.f32.mrf.mxu0
        %v1572 = vadd.f32 %v1451, %v1571
        %1573 = vmatmul.bf16.gmra.mxu0 %v1519
        %v1574 = vpop.f32.mrf.mxu0
        %v1575 = vadd.f32 %v1454, %v1574
        %v1576 = vpop.f32.mrf.mxu0
        %1577 = vmatmul.bf16.gmra.mxu0 %v1522
        %v1578 = vpop.f32.mrf.mxu0
        %v1579 = vadd.f32 %v1458, %v1578
        %v1580 = vpop.f32.mrf.mxu0
        %v1581 = vadd.f32 %v1460, %v1580
        %1582 = vmatmul.bf16.gmra.mxu0 %v1525
        %v1583 = vpop.f32.mrf.mxu0
        %v1584 = vpop.f32.mrf.mxu0
        %v1585 = vadd.f32 %v1464, %v1584
        %1586 = vmatmul.bf16.gmra.mxu0 %v1528
        %v1587 = vpop.f32.mrf.mxu0
        %v1588 = vadd.f32 %v1467, %v1587
        %v1589 = vpop.f32.mrf.mxu0
        %1590 = vdwg.mxu0
        %v1591 = vld [vmem:[#allocation2 + $0x2] sm:$0xff]
        %v1592 = vld [vmem:[#allocation2 + $0xa] sm:$0xff]
        %v1593 = vld [vmem:[#allocation2 + $0x12] sm:$0xff]
        %v1594 = vld [vmem:[#allocation2 + $0x1a] sm:$0xff]
        %v1595 = vld [vmem:[#allocation2 + $0x22] sm:$0xff]
        %v1596 = vld [vmem:[#allocation2 + $0x2a] sm:$0xff]
        %v1597 = vld [vmem:[#allocation2 + $0x32] sm:$0xff]
        %v1598 = vld [vmem:[#allocation2 + $0x3a] sm:$0xff]
        %v1599 = vld [vmem:[#allocation2 + $0x42] sm:$0xff]
        %v1600 = vld [vmem:[#allocation2 + $0x4a] sm:$0xff]
        %v1601 = vld [vmem:[#allocation2 + $0x52] sm:$0xff]
        %v1602 = vld [vmem:[#allocation2 + $0x5a] sm:$0xff]
        %v1603 = vld [vmem:[#allocation2 + $0x62] sm:$0xff]
        %v1604 = vld [vmem:[#allocation2 + $0x6a] sm:$0xff]
        %v1605 = vld [vmem:[#allocation2 + $0x72] sm:$0xff]
        %v1606 = vld [vmem:[#allocation2 + $0x7a] sm:$0xff]
        %v1607 = vld [vmem:[#allocation2 + $0x82] sm:$0xff]
        %v1608 = vld [vmem:[#allocation2 + $0x8a] sm:$0xff]
        %v1609 = vld [vmem:[#allocation2 + $0x92] sm:$0xff]
        %v1610 = vld [vmem:[#allocation2 + $0x9a] sm:$0xff]
        %v1611 = vld [vmem:[#allocation2 + $0xa2] sm:$0xff]
        %v1612 = vld [vmem:[#allocation2 + $0xaa] sm:$0xff]
        %v1613 = vld [vmem:[#allocation2 + $0xb2] sm:$0xff]
        %v1614 = vld [vmem:[#allocation2 + $0xba] sm:$0xff]
        %v1615 = vpack.c.bf16 %v1592, %v1591
        %v1616 = vpack.c.bf16 %v1594, %v1593
        %v1617 = vpack.c.bf16 %v1596, %v1595
        %v1618 = vpack.c.bf16 %v1598, %v1597
        %v1619 = vpack.c.bf16 %v1600, %v1599
        %v1620 = vpack.c.bf16 %v1602, %v1601
        %v1621 = vpack.c.bf16 %v1604, %v1603
        %v1622 = vpack.c.bf16 %v1606, %v1605
        %v1623 = vpack.c.bf16 %v1608, %v1607
        %v1624 = vpack.c.bf16 %v1610, %v1609
        %v1625 = vpack.c.bf16 %v1612, %v1611
        %v1626 = vpack.c.bf16 %v1614, %v1613
        %s1627 = scalar_lea.vmem [#allocation10], 64
        %v1628 = vld [vmem:[%s1627] sm:$0xf]
        %v1629 = vld [vmem:[%s1627 + $0x4] sm:$0xf]
        %v1630 = vld [vmem:[%s1627 + $0x8] sm:$0xf]
        %v1631 = vld [vmem:[%s1627 + $0xc] sm:$0xf]
        %v1632 = vld [vmem:[%s1627 + $0x10] sm:$0xf]
        %v1633 = vld [vmem:[%s1627 + $0x14] sm:$0xf]
        %v1634 = vld [vmem:[%s1627 + $0x18] sm:$0xf]
        %v1635 = vld [vmem:[%s1627 + $0x1c] sm:$0xf]
        %v1644 = vunpack.c.l.b16 %v1628
        %v1645 = vunpack.c.l.b16 %v1629
        %v1646 = vunpack.c.l.b16 %v1630
        %v1647 = vunpack.c.l.b16 %v1631
        %v1648 = vunpack.c.l.b16 %v1632
        %v1649 = vunpack.c.l.b16 %v1633
        %v1650 = vunpack.c.l.b16 %v1634
        %v1651 = vunpack.c.l.b16 %v1635
        %v1652 = vpack.c.b16 %v1645, %v1644
        %v1653 = vpack.c.b16 %v1647, %v1646
        %v1654 = vpack.c.b16 %v1649, %v1648
        %v1655 = vpack.c.b16 %v1651, %v1650
        %v1661 = vsel %vm475, %v1615, 0
        %v1664 = vsel %vm475, %v1616, 0
        %v1667 = vsel %vm475, %v1617, 0
        %v1670 = vsel %vm475, %v1618, 0
        %v1673 = vsel %vm475, %v1619, 0
        %v1676 = vsel %vm475, %v1620, 0
        %v1679 = vsel %vm475, %v1621, 0
        %v1682 = vsel %vm475, %v1622, 0
        %v1685 = vsel %vm475, %v1623, 0
        %v1688 = vsel %vm475, %v1624, 0
        %v1691 = vsel %vm475, %v1625, 0
        %v1694 = vsel %vm475, %v1626, 0
        %1696 = vmatpush.bf16.msra.mxu0 0
        %1697 = vmatpush.bf16.msra.mxu0 0
        %1698 = vmatpush.bf16.msra.mxu0 0
        %1699 = vmatpush.bf16.msra.mxu0 0
        %1700 = vmatpush.bf16.msra.mxu0 %v1655
        %1701 = vmatpush.bf16.msra.mxu0 %v1654
        %1702 = vmatpush.bf16.msra.mxu0 %v1653
        %1703 = vmatpush.bf16.msra.mxu0 %v1652
        %1704 = vmatmul.bf16.gmra.mxu0 %v1661
        %v1705 = vpop.f32.mrf.mxu0
        %v1706 = vadd.f32 0.0, %v1705
        %v1707 = vpop.f32.mrf.mxu0
        %v1708 = vadd.f32 0.0, %v1707
        %1709 = vmatmul.bf16.gmra.mxu0 %v1664
        %v1710 = vpop.f32.mrf.mxu0
        %v1711 = vpop.f32.mrf.mxu0
        %v1712 = vadd.f32 0.0, %v1711
        %1713 = vmatmul.bf16.gmra.mxu0 %v1667
        %v1714 = vpop.f32.mrf.mxu0
        %v1715 = vadd.f32 0.0, %v1714
        %v1716 = vpop.f32.mrf.mxu0
        %1717 = vmatmul.bf16.gmra.mxu0 %v1670
        %v1718 = vpop.f32.mrf.mxu0
        %v1719 = vadd.f32 0.0, %v1718
        %v1720 = vpop.f32.mrf.mxu0
        %v1721 = vadd.f32 0.0, %v1720
        %1722 = vmatmul.bf16.gmra.mxu0 %v1673
        %v1723 = vpop.f32.mrf.mxu0
        %v1724 = vpop.f32.mrf.mxu0
        %v1725 = vadd.f32 0.0, %v1724
        %1726 = vmatmul.bf16.gmra.mxu0 %v1676
        %v1727 = vpop.f32.mrf.mxu0
        %v1728 = vadd.f32 0.0, %v1727
        %v1729 = vpop.f32.mrf.mxu0
        %1730 = vmatmul.bf16.gmra.mxu0 %v1679
        %v1731 = vpop.f32.mrf.mxu0
        %v1732 = vadd.f32 0.0, %v1731
        %v1733 = vpop.f32.mrf.mxu0
        %v1734 = vadd.f32 0.0, %v1733
        %1735 = vmatmul.bf16.gmra.mxu0 %v1682
        %v1736 = vpop.f32.mrf.mxu0
        %v1737 = vpop.f32.mrf.mxu0
        %v1738 = vadd.f32 0.0, %v1737
        %1739 = vmatmul.bf16.gmra.mxu0 %v1685
        %v1740 = vpop.f32.mrf.mxu0
        %v1741 = vadd.f32 0.0, %v1740
        %v1742 = vpop.f32.mrf.mxu0
        %1743 = vmatmul.bf16.gmra.mxu0 %v1688
        %v1744 = vpop.f32.mrf.mxu0
        %v1745 = vadd.f32 0.0, %v1744
        %v1746 = vpop.f32.mrf.mxu0
        %v1747 = vadd.f32 0.0, %v1746
        %1748 = vmatmul.bf16.gmra.mxu0 %v1691
        %v1749 = vpop.f32.mrf.mxu0
        %v1750 = vpop.f32.mrf.mxu0
        %v1751 = vadd.f32 0.0, %v1750
        %1752 = vmatmul.bf16.gmra.mxu0 %v1694
        %v1753 = vpop.f32.mrf.mxu0
        %v1754 = vadd.f32 0.0, %v1753
        %v1755 = vpop.f32.mrf.mxu0
        %1756 = vdwg.mxu0
        %v1757 = vadd.f32 %v1540, %v1706
        %v1758 = vadd.f32 %v1542, %v1708
        %v1759 = vadd.f32 %v1546, %v1712
        %v1760 = vadd.f32 %v1549, %v1715
        %v1761 = vadd.f32 %v1553, %v1719
        %v1762 = vadd.f32 %v1555, %v1721
        %v1763 = vadd.f32 %v1559, %v1725
        %v1764 = vadd.f32 %v1562, %v1728
        %v1765 = vadd.f32 %v1566, %v1732
        %v1766 = vadd.f32 %v1568, %v1734
        %v1767 = vadd.f32 %v1572, %v1738
        %v1768 = vadd.f32 %v1575, %v1741
        %v1769 = vadd.f32 %v1579, %v1745
        %v1770 = vadd.f32 %v1581, %v1747
        %v1771 = vadd.f32 %v1585, %v1751
        %v1772 = vadd.f32 %v1588, %v1754
        %v1773 = vld [vmem:[%s3] sm:$0x1]
        %v1775 = vperm.slane %v1773, 0
        %v1777 = vmul.f32 %v1757, %v1775
        %v1778 = vmul.f32 %v1758, %v1775
        %v1779 = vmul.f32 %v1759, %v1775
        %v1780 = vmul.f32 %v1760, %v1775
        %v1781 = vmul.f32 %v1761, %v1775
        %v1782 = vmul.f32 %v1762, %v1775
        %v1783 = vmul.f32 %v1763, %v1775
        %v1784 = vmul.f32 %v1764, %v1775
        %v1785 = vmul.f32 %v1765, %v1775
        %v1786 = vmul.f32 %v1766, %v1775
        %v1787 = vmul.f32 %v1767, %v1775
        %v1788 = vmul.f32 %v1768, %v1775
        %v1789 = vmul.f32 %v1769, %v1775
        %v1790 = vmul.f32 %v1770, %v1775
        %v1791 = vmul.f32 %v1771, %v1775
        %v1792 = vmul.f32 %v1772, %v1775
        %v1793 = vld [vmem:[%s4] sm:$0x1]
        %v1795 = vperm.slane %v1793, 0
        %v1797 = vadd.f32 %v1777, %v1795
        %v1798 = vadd.f32 %v1778, %v1795
        %v1799 = vadd.f32 %v1779, %v1795
        %v1800 = vadd.f32 %v1780, %v1795
        %v1801 = vadd.f32 %v1781, %v1795
        %v1802 = vadd.f32 %v1782, %v1795
        %v1803 = vadd.f32 %v1783, %v1795
        %v1804 = vadd.f32 %v1784, %v1795
        %v1805 = vadd.f32 %v1785, %v1795
        %v1806 = vadd.f32 %v1786, %v1795
        %v1807 = vadd.f32 %v1787, %v1795
        %v1808 = vadd.f32 %v1788, %v1795
        %v1809 = vadd.f32 %v1789, %v1795
        %v1810 = vadd.f32 %v1790, %v1795
        %v1811 = vadd.f32 %v1791, %v1795
        %v1812 = vadd.f32 %v1792, %v1795
        %v1813 = vmax.f32 %v1797, 0.0
        %v1814 = vmax.f32 %v1798, 0.0
        %v1815 = vmax.f32 %v1799, 0.0
        %v1816 = vmax.f32 %v1800, 0.0
        %v1817 = vmax.f32 %v1801, 0.0
        %v1818 = vmax.f32 %v1802, 0.0
        %v1819 = vmax.f32 %v1803, 0.0
        %v1820 = vmax.f32 %v1804, 0.0
        %v1821 = vmax.f32 %v1805, 0.0
        %v1822 = vmax.f32 %v1806, 0.0
        %v1823 = vmax.f32 %v1807, 0.0
        %v1824 = vmax.f32 %v1808, 0.0
        %v1825 = vmax.f32 %v1809, 0.0
        %v1826 = vmax.f32 %v1810, 0.0
        %v1827 = vmax.f32 %v1811, 0.0
        %v1828 = vmax.f32 %v1812, 0.0
        %1829 = vst [vmem:[#allocation4 + $0x1] sm:$0xff] %v1813
        %1830 = vst [vmem:[#allocation4 + $0x9] sm:$0xff] %v1814
        %1831 = vst [vmem:[#allocation4 + $0x19] sm:$0xff] %v1815
        %1832 = vst [vmem:[#allocation4 + $0x21] sm:$0xff] %v1816
        %1833 = vst [vmem:[#allocation4 + $0x31] sm:$0xff] %v1817
        %1834 = vst [vmem:[#allocation4 + $0x39] sm:$0xff] %v1818
        %1835 = vst [vmem:[#allocation4 + $0x49] sm:$0xff] %v1819
        %1836 = vst [vmem:[#allocation4 + $0x51] sm:$0xff] %v1820
        %1837 = vst [vmem:[#allocation4 + $0x61] sm:$0xff] %v1821
        %1838 = vst [vmem:[#allocation4 + $0x69] sm:$0xff] %v1822
        %1839 = vst [vmem:[#allocation4 + $0x79] sm:$0xff] %v1823
        %1840 = vst [vmem:[#allocation4 + $0x81] sm:$0xff] %v1824
        %1841 = vst [vmem:[#allocation4 + $0x91] sm:$0xff] %v1825
        %1842 = vst [vmem:[#allocation4 + $0x99] sm:$0xff] %v1826
        %1843 = vst [vmem:[#allocation4 + $0xa9] sm:$0xff] %v1827
        %1844 = vst [vmem:[#allocation4 + $0xb1] sm:$0xff] %v1828
        %v1845 = vld [vmem:[#allocation4] sm:$0xff]
        %v1846 = vld [vmem:[#allocation4 + $0x8] sm:$0xff]
        %v1847 = vld [vmem:[#allocation4 + $0x10] sm:$0xff]
        %v1848 = vld [vmem:[#allocation4 + $0x18] sm:$0xff]
        %v1849 = vld [vmem:[#allocation4 + $0x20] sm:$0xff]
        %v1850 = vld [vmem:[#allocation4 + $0x28] sm:$0xff]
        %v1851 = vld [vmem:[#allocation4 + $0x30] sm:$0xff]
        %v1852 = vld [vmem:[#allocation4 + $0x38] sm:$0xff]
        %v1853 = vld [vmem:[#allocation4 + $0x40] sm:$0xff]
        %v1854 = vld [vmem:[#allocation4 + $0x48] sm:$0xff]
        %v1855 = vld [vmem:[#allocation4 + $0x50] sm:$0xff]
        %v1856 = vld [vmem:[#allocation4 + $0x58] sm:$0xff]
        %v1857 = vld [vmem:[#allocation4 + $0x60] sm:$0xff]
        %v1858 = vld [vmem:[#allocation4 + $0x68] sm:$0xff]
        %v1859 = vld [vmem:[#allocation4 + $0x70] sm:$0xff]
        %v1860 = vld [vmem:[#allocation4 + $0x78] sm:$0xff]
        %v1861 = vld [vmem:[#allocation4 + $0x80] sm:$0xff]
        %v1862 = vld [vmem:[#allocation4 + $0x88] sm:$0xff]
        %v1863 = vld [vmem:[#allocation4 + $0x90] sm:$0xff]
        %v1864 = vld [vmem:[#allocation4 + $0x98] sm:$0xff]
        %v1865 = vld [vmem:[#allocation4 + $0xa0] sm:$0xff]
        %v1866 = vld [vmem:[#allocation4 + $0xa8] sm:$0xff]
        %v1867 = vld [vmem:[#allocation4 + $0xb0] sm:$0xff]
        %v1868 = vld [vmem:[#allocation4 + $0xb8] sm:$0xff]
        %v1869 = vpack.c.bf16 %v1846, %v1845
        %v1870 = vpack.c.bf16 %v1848, %v1847
        %v1871 = vpack.c.bf16 %v1850, %v1849
        %v1872 = vpack.c.bf16 %v1852, %v1851
        %v1873 = vpack.c.bf16 %v1854, %v1853
        %v1874 = vpack.c.bf16 %v1856, %v1855
        %v1875 = vpack.c.bf16 %v1858, %v1857
        %v1876 = vpack.c.bf16 %v1860, %v1859
        %v1877 = vpack.c.bf16 %v1862, %v1861
        %v1878 = vpack.c.bf16 %v1864, %v1863
        %v1879 = vpack.c.bf16 %v1866, %v1865
        %v1880 = vpack.c.bf16 %v1868, %v1867
        %v1881 = vld [vmem:[#allocation11] sm:$0xf]
        %v1882 = vld [vmem:[#allocation11 + $0x4] sm:$0xf]
        %v1883 = vld [vmem:[#allocation11 + $0x8] sm:$0xf]
        %v1884 = vld [vmem:[#allocation11 + $0xc] sm:$0xf]
        %v1885 = vld [vmem:[#allocation11 + $0x10] sm:$0xf]
        %v1886 = vld [vmem:[#allocation11 + $0x14] sm:$0xf]
        %v1887 = vld [vmem:[#allocation11 + $0x18] sm:$0xf]
        %v1888 = vld [vmem:[#allocation11 + $0x1c] sm:$0xf]
        %v1889 = vld [vmem:[#allocation11 + $0x20] sm:$0xf]
        %v1890 = vld [vmem:[#allocation11 + $0x24] sm:$0xf]
        %v1891 = vld [vmem:[#allocation11 + $0x28] sm:$0xf]
        %v1892 = vld [vmem:[#allocation11 + $0x2c] sm:$0xf]
        %v1893 = vld [vmem:[#allocation11 + $0x30] sm:$0xf]
        %v1894 = vld [vmem:[#allocation11 + $0x34] sm:$0xf]
        %v1895 = vld [vmem:[#allocation11 + $0x38] sm:$0xf]
        %v1896 = vld [vmem:[#allocation11 + $0x3c] sm:$0xf]
        %v1897 = vld [vmem:[#allocation4 + $0x1] sm:$0xff]
        %v1898 = vld [vmem:[#allocation4 + $0x9] sm:$0xff]
        %v1899 = vld [vmem:[#allocation4 + $0x11] sm:$0xff]
        %v1900 = vld [vmem:[#allocation4 + $0x19] sm:$0xff]
        %v1901 = vld [vmem:[#allocation4 + $0x21] sm:$0xff]
        %v1902 = vld [vmem:[#allocation4 + $0x29] sm:$0xff]
        %v1903 = vld [vmem:[#allocation4 + $0x31] sm:$0xff]
        %v1904 = vld [vmem:[#allocation4 + $0x39] sm:$0xff]
        %v1905 = vld [vmem:[#allocation4 + $0x41] sm:$0xff]
        %v1906 = vld [vmem:[#allocation4 + $0x49] sm:$0xff]
        %v1907 = vld [vmem:[#allocation4 + $0x51] sm:$0xff]
        %v1908 = vld [vmem:[#allocation4 + $0x59] sm:$0xff]
        %v1909 = vld [vmem:[#allocation4 + $0x61] sm:$0xff]
        %v1910 = vld [vmem:[#allocation4 + $0x69] sm:$0xff]
        %v1911 = vld [vmem:[#allocation4 + $0x71] sm:$0xff]
        %v1912 = vld [vmem:[#allocation4 + $0x79] sm:$0xff]
        %v1913 = vld [vmem:[#allocation4 + $0x81] sm:$0xff]
        %v1914 = vld [vmem:[#allocation4 + $0x89] sm:$0xff]
        %v1915 = vld [vmem:[#allocation4 + $0x91] sm:$0xff]
        %v1916 = vld [vmem:[#allocation4 + $0x99] sm:$0xff]
        %v1917 = vld [vmem:[#allocation4 + $0xa1] sm:$0xff]
        %v1918 = vld [vmem:[#allocation4 + $0xa9] sm:$0xff]
        %v1919 = vld [vmem:[#allocation4 + $0xb1] sm:$0xff]
        %v1920 = vld [vmem:[#allocation4 + $0xb9] sm:$0xff]
        %v1921 = vpack.c.bf16 %v1898, %v1897
        %v1922 = vpack.c.bf16 %v1900, %v1899
        %v1923 = vpack.c.bf16 %v1902, %v1901
        %v1924 = vpack.c.bf16 %v1904, %v1903
        %v1925 = vpack.c.bf16 %v1906, %v1905
        %v1926 = vpack.c.bf16 %v1908, %v1907
        %v1927 = vpack.c.bf16 %v1910, %v1909
        %v1928 = vpack.c.bf16 %v1912, %v1911
        %v1929 = vpack.c.bf16 %v1914, %v1913
        %v1930 = vpack.c.bf16 %v1916, %v1915
        %v1931 = vpack.c.bf16 %v1918, %v1917
        %v1932 = vpack.c.bf16 %v1920, %v1919
        %s1933 = scalar_lea.vmem [#allocation11], 64
        %v1934 = vld [vmem:[%s1933] sm:$0xf]
        %v1935 = vld [vmem:[%s1933 + $0x4] sm:$0xf]
        %v1936 = vld [vmem:[%s1933 + $0x8] sm:$0xf]
        %v1937 = vld [vmem:[%s1933 + $0xc] sm:$0xf]
        %v1938 = vld [vmem:[%s1933 + $0x10] sm:$0xf]
        %v1939 = vld [vmem:[%s1933 + $0x14] sm:$0xf]
        %v1940 = vld [vmem:[%s1933 + $0x18] sm:$0xf]
        %v1941 = vld [vmem:[%s1933 + $0x1c] sm:$0xf]
        %v1942 = vld [vmem:[%s1933 + $0x20] sm:$0xf]
        %v1943 = vld [vmem:[%s1933 + $0x24] sm:$0xf]
        %v1944 = vld [vmem:[%s1933 + $0x28] sm:$0xf]
        %v1945 = vld [vmem:[%s1933 + $0x2c] sm:$0xf]
        %v1946 = vld [vmem:[%s1933 + $0x30] sm:$0xf]
        %v1947 = vld [vmem:[%s1933 + $0x34] sm:$0xf]
        %v1948 = vld [vmem:[%s1933 + $0x38] sm:$0xf]
        %v1949 = vld [vmem:[%s1933 + $0x3c] sm:$0xf]
        %v1966 = vunpack.c.l.b16 %v1934
        %v1967 = vunpack.c.l.b16 %v1935
        %v1968 = vunpack.c.l.b16 %v1936
        %v1969 = vunpack.c.l.b16 %v1937
        %v1970 = vunpack.c.l.b16 %v1938
        %v1971 = vunpack.c.l.b16 %v1939
        %v1972 = vunpack.c.l.b16 %v1940
        %v1973 = vunpack.c.l.b16 %v1941
        %v1974 = vunpack.c.l.b16 %v1942
        %v1975 = vunpack.c.l.b16 %v1943
        %v1976 = vunpack.c.l.b16 %v1944
        %v1977 = vunpack.c.l.b16 %v1945
        %v1978 = vunpack.c.l.b16 %v1946
        %v1979 = vunpack.c.l.b16 %v1947
        %v1980 = vunpack.c.l.b16 %v1948
        %v1981 = vunpack.c.l.b16 %v1949
        %v1982 = vpack.c.b16 %v1967, %v1966
        %v1983 = vpack.c.b16 %v1969, %v1968
        %v1984 = vpack.c.b16 %v1971, %v1970
        %v1985 = vpack.c.b16 %v1973, %v1972
        %v1986 = vpack.c.b16 %v1975, %v1974
        %v1987 = vpack.c.b16 %v1977, %v1976
        %v1988 = vpack.c.b16 %v1979, %v1978
        %v1989 = vpack.c.b16 %v1981, %v1980
        %1998 = vmatpush.bf16.msra.mxu0 %v1989
        %1999 = vmatpush.bf16.msra.mxu0 %v1988
        %2000 = vmatpush.bf16.msra.mxu0 %v1987
        %2001 = vmatpush.bf16.msra.mxu0 %v1986
        %2002 = vmatpush.bf16.msra.mxu0 %v1985
        %2003 = vmatpush.bf16.msra.mxu0 %v1984
        %2004 = vmatpush.bf16.msra.mxu0 %v1983
        %2005 = vmatpush.bf16.msra.mxu0 %v1982
        %2006 = vmatmul.bf16.gmra.mxu0 %v1921
        %v2007 = vpop.f32.mrf.mxu0
        %v2008 = vadd.f32 0.0, %v2007
        %v2009 = vpop.f32.mrf.mxu0
        %v2010 = vadd.f32 0.0, %v2009
        %2011 = vmatmul.bf16.gmra.mxu0 %v1922
        %v2012 = vpop.f32.mrf.mxu0
        %v2013 = vpop.f32.mrf.mxu0
        %v2014 = vadd.f32 0.0, %v2013
        %2015 = vmatmul.bf16.gmra.mxu0 %v1923
        %v2016 = vpop.f32.mrf.mxu0
        %v2017 = vadd.f32 0.0, %v2016
        %v2018 = vpop.f32.mrf.mxu0
        %2019 = vmatmul.bf16.gmra.mxu0 %v1924
        %v2020 = vpop.f32.mrf.mxu0
        %v2021 = vadd.f32 0.0, %v2020
        %v2022 = vpop.f32.mrf.mxu0
        %v2023 = vadd.f32 0.0, %v2022
        %2024 = vmatmul.bf16.gmra.mxu0 %v1925
        %v2025 = vpop.f32.mrf.mxu0
        %v2026 = vpop.f32.mrf.mxu0
        %v2027 = vadd.f32 0.0, %v2026
        %2028 = vmatmul.bf16.gmra.mxu0 %v1926
        %v2029 = vpop.f32.mrf.mxu0
        %v2030 = vadd.f32 0.0, %v2029
        %v2031 = vpop.f32.mrf.mxu0
        %2032 = vmatmul.bf16.gmra.mxu0 %v1927
        %v2033 = vpop.f32.mrf.mxu0
        %v2034 = vadd.f32 0.0, %v2033
        %v2035 = vpop.f32.mrf.mxu0
        %v2036 = vadd.f32 0.0, %v2035
        %2037 = vmatmul.bf16.gmra.mxu0 %v1928
        %v2038 = vpop.f32.mrf.mxu0
        %v2039 = vpop.f32.mrf.mxu0
        %v2040 = vadd.f32 0.0, %v2039
        %2041 = vmatmul.bf16.gmra.mxu0 %v1929
        %v2042 = vpop.f32.mrf.mxu0
        %v2043 = vadd.f32 0.0, %v2042
        %v2044 = vpop.f32.mrf.mxu0
        %2045 = vmatmul.bf16.gmra.mxu0 %v1930
        %v2046 = vpop.f32.mrf.mxu0
        %v2047 = vadd.f32 0.0, %v2046
        %v2048 = vpop.f32.mrf.mxu0
        %v2049 = vadd.f32 0.0, %v2048
        %2050 = vmatmul.bf16.gmra.mxu0 %v1931
        %v2051 = vpop.f32.mrf.mxu0
        %v2052 = vpop.f32.mrf.mxu0
        %v2053 = vadd.f32 0.0, %v2052
        %2054 = vmatmul.bf16.gmra.mxu0 %v1932
        %v2055 = vpop.f32.mrf.mxu0
        %v2056 = vadd.f32 0.0, %v2055
        %v2057 = vpop.f32.mrf.mxu0
        %2058 = vdwg.mxu0
        %v2075 = vunpack.c.l.b16 %v1881
        %v2076 = vunpack.c.l.b16 %v1882
        %v2077 = vunpack.c.l.b16 %v1883
        %v2078 = vunpack.c.l.b16 %v1884
        %v2079 = vunpack.c.l.b16 %v1885
        %v2080 = vunpack.c.l.b16 %v1886
        %v2081 = vunpack.c.l.b16 %v1887
        %v2082 = vunpack.c.l.b16 %v1888
        %v2083 = vunpack.c.l.b16 %v1889
        %v2084 = vunpack.c.l.b16 %v1890
        %v2085 = vunpack.c.l.b16 %v1891
        %v2086 = vunpack.c.l.b16 %v1892
        %v2087 = vunpack.c.l.b16 %v1893
        %v2088 = vunpack.c.l.b16 %v1894
        %v2089 = vunpack.c.l.b16 %v1895
        %v2090 = vunpack.c.l.b16 %v1896
        %v2091 = vpack.c.b16 %v2076, %v2075
        %v2092 = vpack.c.b16 %v2078, %v2077
        %v2093 = vpack.c.b16 %v2080, %v2079
        %v2094 = vpack.c.b16 %v2082, %v2081
        %v2095 = vpack.c.b16 %v2084, %v2083
        %v2096 = vpack.c.b16 %v2086, %v2085
        %v2097 = vpack.c.b16 %v2088, %v2087
        %v2098 = vpack.c.b16 %v2090, %v2089
        %2107 = vmatpush.bf16.msra.mxu0 %v2098
        %2108 = vmatpush.bf16.msra.mxu0 %v2097
        %2109 = vmatpush.bf16.msra.mxu0 %v2096
        %2110 = vmatpush.bf16.msra.mxu0 %v2095
        %2111 = vmatpush.bf16.msra.mxu0 %v2094
        %2112 = vmatpush.bf16.msra.mxu0 %v2093
        %2113 = vmatpush.bf16.msra.mxu0 %v2092
        %2114 = vmatpush.bf16.msra.mxu0 %v2091
        %2115 = vmatmul.bf16.gmra.mxu0 %v1869
        %v2116 = vpop.f32.mrf.mxu0
        %v2117 = vadd.f32 %v2008, %v2116
        %v2118 = vpop.f32.mrf.mxu0
        %v2119 = vadd.f32 %v2010, %v2118
        %2120 = vmatmul.bf16.gmra.mxu0 %v1870
        %v2121 = vpop.f32.mrf.mxu0
        %v2122 = vpop.f32.mrf.mxu0
        %v2123 = vadd.f32 %v2014, %v2122
        %2124 = vmatmul.bf16.gmra.mxu0 %v1871
        %v2125 = vpop.f32.mrf.mxu0
        %v2126 = vadd.f32 %v2017, %v2125
        %v2127 = vpop.f32.mrf.mxu0
        %2128 = vmatmul.bf16.gmra.mxu0 %v1872
        %v2129 = vpop.f32.mrf.mxu0
        %v2130 = vadd.f32 %v2021, %v2129
        %v2131 = vpop.f32.mrf.mxu0
        %v2132 = vadd.f32 %v2023, %v2131
        %2133 = vmatmul.bf16.gmra.mxu0 %v1873
        %v2134 = vpop.f32.mrf.mxu0
        %v2135 = vpop.f32.mrf.mxu0
        %v2136 = vadd.f32 %v2027, %v2135
        %2137 = vmatmul.bf16.gmra.mxu0 %v1874
        %v2138 = vpop.f32.mrf.mxu0
        %v2139 = vadd.f32 %v2030, %v2138
        %v2140 = vpop.f32.mrf.mxu0
        %2141 = vmatmul.bf16.gmra.mxu0 %v1875
        %v2142 = vpop.f32.mrf.mxu0
        %v2143 = vadd.f32 %v2034, %v2142
        %v2144 = vpop.f32.mrf.mxu0
        %v2145 = vadd.f32 %v2036, %v2144
        %2146 = vmatmul.bf16.gmra.mxu0 %v1876
        %v2147 = vpop.f32.mrf.mxu0
        %v2148 = vpop.f32.mrf.mxu0
        %v2149 = vadd.f32 %v2040, %v2148
        %2150 = vmatmul.bf16.gmra.mxu0 %v1877
        %v2151 = vpop.f32.mrf.mxu0
        %v2152 = vadd.f32 %v2043, %v2151
        %v2153 = vpop.f32.mrf.mxu0
        %2154 = vmatmul.bf16.gmra.mxu0 %v1878
        %v2155 = vpop.f32.mrf.mxu0
        %v2156 = vadd.f32 %v2047, %v2155
        %v2157 = vpop.f32.mrf.mxu0
        %v2158 = vadd.f32 %v2049, %v2157
        %2159 = vmatmul.bf16.gmra.mxu0 %v1879
        %v2160 = vpop.f32.mrf.mxu0
        %v2161 = vpop.f32.mrf.mxu0
        %v2162 = vadd.f32 %v2053, %v2161
        %2163 = vmatmul.bf16.gmra.mxu0 %v1880
        %v2164 = vpop.f32.mrf.mxu0
        %v2165 = vadd.f32 %v2056, %v2164
        %v2166 = vpop.f32.mrf.mxu0
        %2167 = vdwg.mxu0
        %v2168 = vld [vmem:[#allocation4 + $0x2] sm:$0xff]
        %v2169 = vld [vmem:[#allocation4 + $0xa] sm:$0xff]
        %v2170 = vld [vmem:[#allocation4 + $0x12] sm:$0xff]
        %v2171 = vld [vmem:[#allocation4 + $0x1a] sm:$0xff]
        %v2172 = vld [vmem:[#allocation4 + $0x22] sm:$0xff]
        %v2173 = vld [vmem:[#allocation4 + $0x2a] sm:$0xff]
        %v2174 = vld [vmem:[#allocation4 + $0x32] sm:$0xff]
        %v2175 = vld [vmem:[#allocation4 + $0x3a] sm:$0xff]
        %v2176 = vld [vmem:[#allocation4 + $0x42] sm:$0xff]
        %v2177 = vld [vmem:[#allocation4 + $0x4a] sm:$0xff]
        %v2178 = vld [vmem:[#allocation4 + $0x52] sm:$0xff]
        %v2179 = vld [vmem:[#allocation4 + $0x5a] sm:$0xff]
        %v2180 = vld [vmem:[#allocation4 + $0x62] sm:$0xff]
        %v2181 = vld [vmem:[#allocation4 + $0x6a] sm:$0xff]
        %v2182 = vld [vmem:[#allocation4 + $0x72] sm:$0xff]
        %v2183 = vld [vmem:[#allocation4 + $0x7a] sm:$0xff]
        %v2184 = vld [vmem:[#allocation4 + $0x82] sm:$0xff]
        %v2185 = vld [vmem:[#allocation4 + $0x8a] sm:$0xff]
        %v2186 = vld [vmem:[#allocation4 + $0x92] sm:$0xff]
        %v2187 = vld [vmem:[#allocation4 + $0x9a] sm:$0xff]
        %v2188 = vld [vmem:[#allocation4 + $0xa2] sm:$0xff]
        %v2189 = vld [vmem:[#allocation4 + $0xaa] sm:$0xff]
        %v2190 = vld [vmem:[#allocation4 + $0xb2] sm:$0xff]
        %v2191 = vld [vmem:[#allocation4 + $0xba] sm:$0xff]
        %v2192 = vpack.c.bf16 %v2169, %v2168
        %v2193 = vpack.c.bf16 %v2171, %v2170
        %v2194 = vpack.c.bf16 %v2173, %v2172
        %v2195 = vpack.c.bf16 %v2175, %v2174
        %v2196 = vpack.c.bf16 %v2177, %v2176
        %v2197 = vpack.c.bf16 %v2179, %v2178
        %v2198 = vpack.c.bf16 %v2181, %v2180
        %v2199 = vpack.c.bf16 %v2183, %v2182
        %v2200 = vpack.c.bf16 %v2185, %v2184
        %v2201 = vpack.c.bf16 %v2187, %v2186
        %v2202 = vpack.c.bf16 %v2189, %v2188
        %v2203 = vpack.c.bf16 %v2191, %v2190
        %s2204 = scalar_lea.vmem [#allocation11], 128
        %v2205 = vld [vmem:[%s2204] sm:$0xf]
        %v2206 = vld [vmem:[%s2204 + $0x4] sm:$0xf]
        %v2207 = vld [vmem:[%s2204 + $0x8] sm:$0xf]
        %v2208 = vld [vmem:[%s2204 + $0xc] sm:$0xf]
        %v2209 = vld [vmem:[%s2204 + $0x10] sm:$0xf]
        %v2210 = vld [vmem:[%s2204 + $0x14] sm:$0xf]
        %v2211 = vld [vmem:[%s2204 + $0x18] sm:$0xf]
        %v2212 = vld [vmem:[%s2204 + $0x1c] sm:$0xf]
        %v2213 = vld [vmem:[%s2204 + $0x20] sm:$0xf]
        %v2214 = vld [vmem:[%s2204 + $0x24] sm:$0xf]
        %v2215 = vld [vmem:[%s2204 + $0x28] sm:$0xf]
        %v2216 = vld [vmem:[%s2204 + $0x2c] sm:$0xf]
        %v2217 = vld [vmem:[%s2204 + $0x30] sm:$0xf]
        %v2218 = vld [vmem:[%s2204 + $0x34] sm:$0xf]
        %v2219 = vld [vmem:[%s2204 + $0x38] sm:$0xf]
        %v2220 = vld [vmem:[%s2204 + $0x3c] sm:$0xf]
        %v2237 = vunpack.c.l.b16 %v2205
        %v2238 = vunpack.c.l.b16 %v2206
        %v2239 = vunpack.c.l.b16 %v2207
        %v2240 = vunpack.c.l.b16 %v2208
        %v2241 = vunpack.c.l.b16 %v2209
        %v2242 = vunpack.c.l.b16 %v2210
        %v2243 = vunpack.c.l.b16 %v2211
        %v2244 = vunpack.c.l.b16 %v2212
        %v2245 = vunpack.c.l.b16 %v2213
        %v2246 = vunpack.c.l.b16 %v2214
        %v2247 = vunpack.c.l.b16 %v2215
        %v2248 = vunpack.c.l.b16 %v2216
        %v2249 = vunpack.c.l.b16 %v2217
        %v2250 = vunpack.c.l.b16 %v2218
        %v2251 = vunpack.c.l.b16 %v2219
        %v2252 = vunpack.c.l.b16 %v2220
        %v2253 = vpack.c.b16 %v2238, %v2237
        %v2254 = vpack.c.b16 %v2240, %v2239
        %v2255 = vpack.c.b16 %v2242, %v2241
        %v2256 = vpack.c.b16 %v2244, %v2243
        %v2257 = vpack.c.b16 %v2246, %v2245
        %v2258 = vpack.c.b16 %v2248, %v2247
        %v2259 = vpack.c.b16 %v2250, %v2249
        %v2260 = vpack.c.b16 %v2252, %v2251
        %2269 = vmatpush.bf16.msra.mxu0 %v2260
        %2270 = vmatpush.bf16.msra.mxu0 %v2259
        %2271 = vmatpush.bf16.msra.mxu0 %v2258
        %2272 = vmatpush.bf16.msra.mxu0 %v2257
        %2273 = vmatpush.bf16.msra.mxu0 %v2256
        %2274 = vmatpush.bf16.msra.mxu0 %v2255
        %2275 = vmatpush.bf16.msra.mxu0 %v2254
        %2276 = vmatpush.bf16.msra.mxu0 %v2253
        %2277 = vmatmul.bf16.gmra.mxu0 %v2192
        %v2278 = vpop.f32.mrf.mxu0
        %v2279 = vadd.f32 0.0, %v2278
        %v2280 = vpop.f32.mrf.mxu0
        %v2281 = vadd.f32 0.0, %v2280
        %2282 = vmatmul.bf16.gmra.mxu0 %v2193
        %v2283 = vpop.f32.mrf.mxu0
        %v2284 = vpop.f32.mrf.mxu0
        %v2285 = vadd.f32 0.0, %v2284
        %2286 = vmatmul.bf16.gmra.mxu0 %v2194
        %v2287 = vpop.f32.mrf.mxu0
        %v2288 = vadd.f32 0.0, %v2287
        %v2289 = vpop.f32.mrf.mxu0
        %2290 = vmatmul.bf16.gmra.mxu0 %v2195
        %v2291 = vpop.f32.mrf.mxu0
        %v2292 = vadd.f32 0.0, %v2291
        %v2293 = vpop.f32.mrf.mxu0
        %v2294 = vadd.f32 0.0, %v2293
        %2295 = vmatmul.bf16.gmra.mxu0 %v2196
        %v2296 = vpop.f32.mrf.mxu0
        %v2297 = vpop.f32.mrf.mxu0
        %v2298 = vadd.f32 0.0, %v2297
        %2299 = vmatmul.bf16.gmra.mxu0 %v2197
        %v2300 = vpop.f32.mrf.mxu0
        %v2301 = vadd.f32 0.0, %v2300
        %v2302 = vpop.f32.mrf.mxu0
        %2303 = vmatmul.bf16.gmra.mxu0 %v2198
        %v2304 = vpop.f32.mrf.mxu0
        %v2305 = vadd.f32 0.0, %v2304
        %v2306 = vpop.f32.mrf.mxu0
        %v2307 = vadd.f32 0.0, %v2306
        %2308 = vmatmul.bf16.gmra.mxu0 %v2199
        %v2309 = vpop.f32.mrf.mxu0
        %v2310 = vpop.f32.mrf.mxu0
        %v2311 = vadd.f32 0.0, %v2310
        %2312 = vmatmul.bf16.gmra.mxu0 %v2200
        %v2313 = vpop.f32.mrf.mxu0
        %v2314 = vadd.f32 0.0, %v2313
        %v2315 = vpop.f32.mrf.mxu0
        %2316 = vmatmul.bf16.gmra.mxu0 %v2201
        %v2317 = vpop.f32.mrf.mxu0
        %v2318 = vadd.f32 0.0, %v2317
        %v2319 = vpop.f32.mrf.mxu0
        %v2320 = vadd.f32 0.0, %v2319
        %2321 = vmatmul.bf16.gmra.mxu0 %v2202
        %v2322 = vpop.f32.mrf.mxu0
        %v2323 = vpop.f32.mrf.mxu0
        %v2324 = vadd.f32 0.0, %v2323
        %2325 = vmatmul.bf16.gmra.mxu0 %v2203
        %v2326 = vpop.f32.mrf.mxu0
        %v2327 = vadd.f32 0.0, %v2326
        %v2328 = vpop.f32.mrf.mxu0
        %2329 = vdwg.mxu0
        %v2330 = vadd.f32 %v2117, %v2279
        %v2331 = vadd.f32 %v2119, %v2281
        %v2332 = vadd.f32 %v2123, %v2285
        %v2333 = vadd.f32 %v2126, %v2288
        %v2334 = vadd.f32 %v2130, %v2292
        %v2335 = vadd.f32 %v2132, %v2294
        %v2336 = vadd.f32 %v2136, %v2298
        %v2337 = vadd.f32 %v2139, %v2301
        %v2338 = vadd.f32 %v2143, %v2305
        %v2339 = vadd.f32 %v2145, %v2307
        %v2340 = vadd.f32 %v2149, %v2311
        %v2341 = vadd.f32 %v2152, %v2314
        %v2342 = vadd.f32 %v2156, %v2318
        %v2343 = vadd.f32 %v2158, %v2320
        %v2344 = vadd.f32 %v2162, %v2324
        %v2345 = vadd.f32 %v2165, %v2327
        %v2346 = vld [vmem:[%s471] sm:$0xff]
        %v2347 = vld [vmem:[%s471 + $0x8] sm:$0xff]
        %v2348 = vld [vmem:[%s471 + $0x10] sm:$0xff]
        %v2349 = vld [vmem:[%s471 + $0x18] sm:$0xff]
        %v2350 = vld [vmem:[%s471 + $0x20] sm:$0xff]
        %v2351 = vld [vmem:[%s471 + $0x28] sm:$0xff]
        %v2352 = vld [vmem:[%s471 + $0x30] sm:$0xff]
        %v2353 = vld [vmem:[%s471 + $0x38] sm:$0xff]
        %v2354 = vld [vmem:[%s471 + $0x40] sm:$0xff]
        %v2355 = vld [vmem:[%s471 + $0x48] sm:$0xff]
        %v2356 = vld [vmem:[%s471 + $0x50] sm:$0xff]
        %v2357 = vld [vmem:[%s471 + $0x58] sm:$0xff]
        %v2358 = vld [vmem:[%s471 + $0x60] sm:$0xff]
        %v2359 = vld [vmem:[%s471 + $0x68] sm:$0xff]
        %v2360 = vld [vmem:[%s471 + $0x70] sm:$0xff]
        %v2361 = vld [vmem:[%s471 + $0x78] sm:$0xff]
        %v2362 = vadd.f32 %v2346, %v2330
        %v2363 = vadd.f32 %v2347, %v2331
        %v2364 = vadd.f32 %v2348, %v2332
        %v2365 = vadd.f32 %v2349, %v2333
        %v2366 = vadd.f32 %v2350, %v2334
        %v2367 = vadd.f32 %v2351, %v2335
        %v2368 = vadd.f32 %v2352, %v2336
        %v2369 = vadd.f32 %v2353, %v2337
        %v2370 = vadd.f32 %v2354, %v2338
        %v2371 = vadd.f32 %v2355, %v2339
        %v2372 = vadd.f32 %v2356, %v2340
        %v2373 = vadd.f32 %v2357, %v2341
        %v2374 = vadd.f32 %v2358, %v2342
        %v2375 = vadd.f32 %v2359, %v2343
        %v2376 = vadd.f32 %v2360, %v2344
        %v2377 = vadd.f32 %v2361, %v2345
        %2378 = vst [vmem:[%s471] sm:$0xff] %v2362
        %2379 = vst [vmem:[%s471 + $0x8] sm:$0xff] %v2363
        %2380 = vst [vmem:[%s471 + $0x10] sm:$0xff] %v2364
        %2381 = vst [vmem:[%s471 + $0x18] sm:$0xff] %v2365
        %2382 = vst [vmem:[%s471 + $0x20] sm:$0xff] %v2366
        %2383 = vst [vmem:[%s471 + $0x28] sm:$0xff] %v2367
        %2384 = vst [vmem:[%s471 + $0x30] sm:$0xff] %v2368
        %2385 = vst [vmem:[%s471 + $0x38] sm:$0xff] %v2369
        %2386 = vst [vmem:[%s471 + $0x40] sm:$0xff] %v2370
        %2387 = vst [vmem:[%s471 + $0x48] sm:$0xff] %v2371
        %2388 = vst [vmem:[%s471 + $0x50] sm:$0xff] %v2372
        %2389 = vst [vmem:[%s471 + $0x58] sm:$0xff] %v2373
        %2390 = vst [vmem:[%s471 + $0x60] sm:$0xff] %v2374
        %2391 = vst [vmem:[%s471 + $0x68] sm:$0xff] %v2375
        %2392 = vst [vmem:[%s471 + $0x70] sm:$0xff] %v2376
        %2393 = vst [vmem:[%s471 + $0x78] sm:$0xff] %v2377
        %s2394 = sand.u32 %s274, 1
        %s2395 = scalar_lea.sflag [#allocation7], %s2394
        %s2396 = sand.u32 %s274, 1
        %s2397 = smul.addr %s2396, 128
        %s2398 = scalar_lea.vmem [#allocation14], %s2397
        // Predicated region
        $region85: #{tpu_custom_call.1} parent=63 // pred_check
          %p2399 = pneg %p284
        $region86: #{tpu_custom_call.1} parent=63 // pred_check_branch
          %2401 = sbr.rel (%p2399) target = $region88
        $region87: #{tpu_custom_call.1} parent=63 // pred_region
          %s2402 = smul.u32 8, %s30
          %2404 = vsyncadd %s2395, 0
          %s2405 = smul.addr %s2402, 2
          %s2406 = smul.addr %s2405, 8
          %s2407 = scalar_lea.hbm %s11, %s2406
          %s2408 = sshll.u32 %s2398, 4
          %s2409 = int_to_ptr.vmem [resolvable:$true] %s2408
          %s2410 = sshll.u32 %s2407, 4
          %s2411 = int_to_ptr.hbm [resolvable:$true] %s2410
          %2416 = dma.vmem_to_hbm [thread:$0]  %s2409, 2048, %s2411, %s2395, 128, 128, 8
        $region88: #{tpu_custom_call.1} parent=63 // pred_fallthru
          _
      $region64: #{tpu_custom_call.1} parent=5 // pred_fallthru
        _
      %p2417 = scmp.le.s32.totalorder 2, %s25
      // Predicated region
      $region89: #{tpu_custom_call.1} parent=5 // pred_check
        %p2418 = pneg %p2417
      $region90: #{tpu_custom_call.1} parent=5 // pred_check_branch
        %2420 = sbr.rel (%p2418) target = $region92
      $region91: #{tpu_custom_call.1} parent=5 // pred_region
        %s2421 = ssub.s32 %s25, 2
        // Predicated region
        $region93: #{tpu_custom_call.1} parent=91 // pred_check
          %p2422 = pneg %p290
        $region94: #{tpu_custom_call.1} parent=91 // pred_check_branch
          %2424 = sbr.rel (%p2422) target = $region96
        $region95: #{tpu_custom_call.1} parent=91 // pred_region
          %s2425 = sand.u32 %s275, 1
          %s2426 = scalar_lea.sflag [#allocation7], %s2425
          %s2427 = sand.u32 %s275, 1
          %s2428 = smul.addr %s2427, 128
          %s2429 = scalar_lea.vmem [#allocation14], %s2428
          %2431 = dma.done %s2426, 2048
        $region96: #{tpu_custom_call.1} parent=91 // pred_fallthru
          _
      $region92: #{tpu_custom_call.1} parent=5 // pred_fallthru
        _
    $region6: #{tpu_custom_call.1} parent=1 // loop_footer
      %s29 = sadd.s32 1, %s25
    $region7: #{tpu_custom_call.1} parent=1 // loop_footer_branch
      %24 = sbr.rel target = $region3
    $region8: #{tpu_custom_call.1} parent=1 // loop_exit
      _
    %2432 = vsyncpa [#allocation6], 1
    %s2433 = scalar_lea.sflag [#allocation6], 1
    %2434 = vsyncpa %s2433, 1
    %2435 = vsyncpa [#allocation9], 1
    %2436 = vsyncpa [#allocation12], 1
    %2437 = vsyncpa [#allocation7], 1
    %s2438 = scalar_lea.sflag [#allocation7], 1
    %2439 = vsyncpa %s2438, 1

</llo_original>
